<compile_context>
chip_gen: v6e
topology: v6e:2x2x1
jax: 0.10.0
libtpu: 0.0.40
codegen_flags: <defaults>
</compile_context>

<pallas_src>
import functools

import jax
import jax.numpy as jnp
from jax.experimental import pallas as pl
from jax.experimental.pallas import tpu as pltpu

SELU_ALPHA = 1.6732632423543772
SELU_SCALE = 1.0507009873554805
N_LAYERS = 8  # lin1 .. lin7, lin_last


def _round_up(n, m):
    return ((n + m - 1) // m) * m


def _selu_pair(mu, sigma):
    """SELU on the mean; first-order variance propagation sigma * selu'(mu)^2."""
    e = jnp.exp(mu)
    mu_a = SELU_SCALE * jnp.where(mu > 0, mu, SELU_ALPHA * (e - 1.0))
    d = SELU_SCALE * jnp.where(mu > 0, jnp.ones_like(mu), SELU_ALPHA * e)
    return mu_a, sigma * d * d


# ------------------------------ Pallas kernel ------------------------------
def vdp_mlp_kernel(w_ref, x_ref, out_ref, lhs_ref, *, n_classes, d, bias_row):
    """Fused forward for the whole 8-layer VDP MLP (one batch tile).

    Transposed layout (batch on lanes):
      w_ref   : (N_LAYERS, 2*d, K) resident weight stack;
                mu-half rows    = [Wmu | 0 | 0 | bias-col | 0]
                sigma-half rows = [0 | softplus(Wsig) | Wmu^2 | 0]
      x_ref   : (d, bb)   zero-padded inputs (features on sublanes).
      out_ref : (2*d, bb) [softmax_mu ; sigma] packed along sublanes.
      lhs_ref : (K, bb)   VMEM scratch: [mu ; mu^2+sig ; sig ; ones/zero pad].
    """
    bb = x_ref.shape[1]
    K = lhs_ref.shape[0]

    # Tail rows of the LHS scratch: a single "ones" row at bias_row (the bias
    # is folded into that weight column), zeros elsewhere.  Sublane-aligned.
    tail_rows = K - 3 * d
    r = jax.lax.broadcasted_iota(jnp.int32, (tail_rows, bb), 0)
    lhs_ref[3 * d:, :] = jnp.where(r == (bias_row - 3 * d), 1.0, 0.0).astype(
        jnp.float32)

    mu = x_ref[...]
    sigma = jnp.zeros((d, bb), jnp.float32)  # lin1 (input_flag): sigma_in = 0

    for l in range(N_LAYERS):
        # Sublane-aligned block stores into the persistent LHS scratch.
        lhs_ref[0:d, :] = mu
        lhs_ref[d:2 * d, :] = mu * mu + sigma
        lhs_ref[2 * d:3 * d, :] = sigma
        lhs = lhs_ref[...].astype(w_ref.dtype)  # no-op for f32 weights
        fused = jnp.dot(w_ref[l], lhs, preferred_element_type=jnp.float32)
        new_mu = fused[:d, :]       # Wmu @ mu + bias
        new_sigma = fused[d:, :]    # sp(Wsig) @ (mu^2+sig) + Wmu^2 @ sig
        if l < N_LAYERS - 1:
            mu, sigma = _selu_pair(new_mu, new_sigma)
        else:
            mu, sigma = new_mu, new_sigma

    # vdp.Softmax head over the n_classes valid sublane rows (rest is the zero
    # padding introduced by the stacked weights).
    row = jax.lax.broadcasted_iota(jnp.int32, (d, bb), 0)
    valid = row < n_classes
    mu_m = jnp.where(valid, mu, -1e30)
    m = jnp.max(mu_m, axis=0, keepdims=True)
    e = jnp.where(valid, jnp.exp(mu_m - m), 0.0)
    s = jnp.sum(e, axis=0, keepdims=True)
    inv = pl.reciprocal(s, approx=True)   # EUP slot (otherwise idle)
    inv = inv * (2.0 - s * inv)           # one Newton step -> full f32 accuracy
    p = e * inv
    grad = p * (1.0 - p)
    out_ref[0:d, :] = p
    out_ref[d:, :] = sigma * grad * grad


# ------------------------------ host wrapper -------------------------------
def prepare_vdp_params(params, mxu_dtype=jnp.float32):
    """Pack 8 layers of (W_mu [out,in], b_mu [out], W_sigma [out,in]) ONCE per
    weight set into a single transposed, zero-padded stack (N_LAYERS, 2d, K).

    Pass mxu_dtype=jnp.bfloat16 on v6e/v7x to feed the MXU bf16 operands (the
    kernel casts the LHS to match); keep f32 if the variance half needs full
    precision.
    """
    n_feats = params[0][0].shape[1]
    n_classes = params[-1][0].shape[0]
    widths = [p[0].shape[0] for p in params] + [p[0].shape[1] for p in params]
    d = _round_up(max(widths), 8)
    K = _round_up(3 * d + 1, 128)  # lane-aligned contraction; >=1 spare row
    bias_row = 3 * d               # spare padding row used as the "ones" row

    blocks = []
    for (wmu, bmu, wsig) in params:
        wmu = jnp.asarray(wmu, jnp.float32)
        bmu = jnp.asarray(bmu, jnp.float32)
        wsig = jnp.asarray(wsig, jnp.float32)
        fan_out, fan_in = wmu.shape
        blk = jnp.zeros((2 * d, K), jnp.float32)
        blk = blk.at[:fan_out, :fan_in].set(wmu)                          # mu half
        blk = blk.at[d:d + fan_out, d:d + fan_in].set(jax.nn.softplus(wsig))
        blk = blk.at[d:d + fan_out, 2 * d:2 * d + fan_in].set(wmu * wmu)  # sig half
        blk = blk.at[:fan_out, bias_row].set(bmu)                         # bias col
        blocks.append(blk)
    w_stack = jnp.stack(blocks).astype(mxu_dtype)  # (N_LAYERS, 2*d, K)
    return dict(w_stack=w_stack, d=d, K=K, bias_row=bias_row,
                n_feats=n_feats, n_classes=n_classes)


def _choose_block_b(batch, block_b):
    """Lane-dense batch tile (>=128), capped by batch; prefer >=2 grid steps
    for mid/large batches so both v7x TensorCores get work."""
    bb = max(128, min(_round_up(block_b, 128), _round_up(batch, 128)))
    if batch > 128 and _round_up(batch, bb) // bb < 2:
        bb = _round_up(-(-batch // 2), 128)
    return bb


def vdp_mlp_forward(x, packed, *, block_b=256):
    """x: (batch, n_feats).  packed: output of prepare_vdp_params (reused across
    calls).  block_b can be swept upward (512-2048) for very large batches."""
    w_stack = packed["w_stack"]
    d, K = packed["d"], packed["K"]
    n_feats, n_classes = packed["n_feats"], packed["n_classes"]

    x = jnp.asarray(x, jnp.float32)
    batch = x.shape[0]
    bb = _choose_block_b(batch, block_b)
    b_pad = _round_up(batch, bb)

    # Transposed layout: batch maps to lanes.
    x_pad = jnp.zeros((d, b_pad), jnp.float32).at[:n_feats, :batch].set(x.T)

    kernel = functools.partial(vdp_mlp_kernel, n_classes=n_classes, d=d,
                               bias_row=packed["bias_row"])
    out = pl.pallas_call(
        kernel,
        out_shape=jax.ShapeDtypeStruct((2 * d, b_pad), jnp.float32),
        grid_spec=pltpu.PrefetchScalarGridSpec(
            num_scalar_prefetch=0,
            grid=(b_pad // bb,),
            in_specs=[
                # Weight stack: constant block index -> VMEM resident.
                pl.BlockSpec((N_LAYERS, 2 * d, K), lambda i: (0, 0, 0)),
                pl.BlockSpec((d, bb), lambda i: (0, i)),
            ],
            out_specs=pl.BlockSpec((2 * d, bb), lambda i: (0, i)),
            scratch_shapes=[pltpu.VMEM((K, bb), jnp.float32)],
        ),
        compiler_params=pltpu.CompilerParams(
            dimension_semantics=("parallel",)),
    )(w_stack, x_pad)

    mu_out = out[:n_classes, :batch].T
    sigma_out = out[d:d + n_classes, :batch].T
    return mu_out, sigma_out


# --------------------------- pure-JAX reference ----------------------------
def _ref_forward(x, params):
    def selu_pair(mu, sigma):
        e = jnp.exp(mu)
        mu_a = SELU_SCALE * jnp.where(mu > 0, mu, SELU_ALPHA * (e - 1.0))
        dd = SELU_SCALE * jnp.where(mu > 0, jnp.ones_like(mu), SELU_ALPHA * e)
        return mu_a, sigma * dd * dd

    wmu, bmu, wsig = params[0]
    mu = x @ wmu.T + bmu
    sigma = (x * x) @ jax.nn.softplus(wsig).T
    mu, sigma = selu_pair(mu, sigma)
    for l in range(1, N_LAYERS):
        wmu, bmu, wsig = params[l]
        sp = jax.nn.softplus(wsig)
        new_mu = mu @ wmu.T + bmu
        new_sigma = (mu * mu + sigma) @ sp.T + sigma @ (wmu * wmu).T
        mu, sigma = new_mu, new_sigma
        if l < N_LAYERS - 1:
            mu, sigma = selu_pair(mu, sigma)
    p = jax.nn.softmax(mu, axis=-1)
    g = p * (1.0 - p)
    return p, sigma * g * g


def make_params(key, n_feats, n_nodes, n_classes):
    dims = [(n_feats, n_nodes)] + [(n_nodes, n_nodes)] * 6 + [(n_nodes, n_classes)]
    params = []
    for (fan_in, fan_out) in dims:
        key, k1, k2, k3 = jax.random.split(key, 4)
        scale = 1.0 / jnp.sqrt(fan_in)
        wmu = jax.random.uniform(k1, (fan_out, fan_in), jnp.float32, -scale, scale)
        bmu = jax.random.uniform(k2, (fan_out,), jnp.float32, -scale, scale)
        # small negative raw sigma weights -> small softplus variances
        wsig = jax.random.uniform(k3, (fan_out, fan_in), jnp.float32, -4.0, -3.0)
        params.append((wmu, bmu, wsig))
    return params


if __name__ == "__main__":
    # IRIS-like sizes: 4 features, 32 hidden nodes, 3 classes; batch 150 with
    # block_b=128 exercises a 2-step parallel batch grid with resident weights.
    n_feats, n_nodes, n_classes, batch = 4, 32, 3, 150
    key = jax.random.PRNGKey(0)
    key, kx = jax.random.split(key)
    x = jax.random.normal(kx, (batch, n_feats), jnp.float32)
    params = make_params(key, n_feats, n_nodes, n_classes)

    packed = prepare_vdp_params(params)  # packed once per weight set
    fwd = jax.jit(lambda xb: vdp_mlp_forward(xb, packed, block_b=128))

    mu, sigma = fwd(x)
    mu, sigma = jax.block_until_ready(mu), jax.block_until_ready(sigma)

    mu_ref, sigma_ref = _ref_forward(x, params)
    assert mu.shape == (batch, n_classes) and sigma.shape == (batch, n_classes)
    assert jnp.allclose(mu, mu_ref, rtol=1e-3, atol=1e-6), (
        float(jnp.max(jnp.abs(mu - mu_ref))))
    assert jnp.allclose(sigma, sigma_ref, rtol=1e-3, atol=1e-6), (
        float(jnp.max(jnp.abs(sigma - sigma_ref))))
    # TODO(synk): vdp.ELBOLoss / gather_kl / scale_hyperp and the fit/score
    # training utilities are not part of forward(); intentionally not ported.
    print("KERNEL_OK")
</pallas_src>

<mosaic_0001>
module attributes {stable_mosaic.version = 11 : i64} {
  func.func @vdp_mlp_kernel(%arg0: i32, %arg1: memref<8x64x128xf32, #tpu.memory_space<vmem>>, %arg2: memref<32x128xf32, #tpu.memory_space<vmem>>, %arg3: memref<64x128xf32, #tpu.memory_space<vmem>>, %arg4: memref<128x128xf32, #tpu.memory_space<vmem>>) attributes {dimension_semantics = [#tpu.dimension_semantics<parallel>], iteration_bounds = array<i64: 2>, scalar_prefetch = 0 : i64, scratch_operands = 1 : i64, tpu.core_type = #tpu.core_type<tc>, window_params = [{pipeline_mode = #tpu.pipeline_mode<synchronous>, transform_indices = @transform_0, window_bounds = array<i64: 8, 64, 128>}, {transform_indices = @transform_1, window_bounds = array<i64: 32, 128>}, {transform_indices = @transform_2, window_bounds = array<i64: 64, 128>}]} {
    %0 = tpu.iota {dimensions = array<i32: 0>} : vector<32x128xi32>
    %c0_i32 = arith.constant 0 : i32
    %1 = vector.broadcast %c0_i32 : i32 to vector<32x128xi32>
    %2 = arith.cmpi eq, %0, %1 : vector<32x128xi32>
    %cst = arith.constant 1.000000e+00 : f32
    %cst_0 = arith.constant 0.000000e+00 : f32
    %3 = vector.broadcast %cst : f32 to vector<32x128xf32>
    %4 = vector.broadcast %cst_0 : f32 to vector<32x128xf32>
    %5 = arith.select %2, %3, %4 : vector<32x128xi1>, vector<32x128xf32>
    %c96 = arith.constant 96 : index
    %c0 = arith.constant 0 : index
    %6 = vector.load %arg4[%c96, %c0] : memref<128x128xf32, #tpu.memory_space<vmem>>, vector<32x128xf32>
    tpu.vector_store %arg4[%c96, %c0], %5 {strides = array<i32>} : memref<128x128xf32, #tpu.memory_space<vmem>>, vector<32x128xf32>,
    %c0_1 = arith.constant 0 : index
    %c0_2 = arith.constant 0 : index
    %7 = vector.load %arg2[%c0_1, %c0_2] : memref<32x128xf32, #tpu.memory_space<vmem>>, vector<32x128xf32>
    %cst_3 = arith.constant 0.000000e+00 : f32
    %8 = vector.broadcast %cst_3 : f32 to vector<32x128xf32>
    %c0_4 = arith.constant 0 : index
    %c0_5 = arith.constant 0 : index
    %9 = vector.load %arg4[%c0_4, %c0_5] : memref<128x128xf32, #tpu.memory_space<vmem>>, vector<32x128xf32>
    tpu.vector_store %arg4[%c0_4, %c0_5], %7 {strides = array<i32>} : memref<128x128xf32, #tpu.memory_space<vmem>>, vector<32x128xf32>,
    %10 = arith.mulf %7, %7 : vector<32x128xf32>
    %11 = arith.addf %10, %8 : vector<32x128xf32>
    %c32 = arith.constant 32 : index
    %c0_6 = arith.constant 0 : index
    %12 = vector.load %arg4[%c32, %c0_6] : memref<128x128xf32, #tpu.memory_space<vmem>>, vector<32x128xf32>
    tpu.vector_store %arg4[%c32, %c0_6], %11 {strides = array<i32>} : memref<128x128xf32, #tpu.memory_space<vmem>>, vector<32x128xf32>,
    %c64 = arith.constant 64 : index
    %c0_7 = arith.constant 0 : index
    %13 = vector.load %arg4[%c64, %c0_7] : memref<128x128xf32, #tpu.memory_space<vmem>>, vector<32x128xf32>
    tpu.vector_store %arg4[%c64, %c0_7], %8 {strides = array<i32>} : memref<128x128xf32, #tpu.memory_space<vmem>>, vector<32x128xf32>,
    %c0_8 = arith.constant 0 : index
    %c0_9 = arith.constant 0 : index
    %14 = vector.load %arg4[%c0_8, %c0_9] : memref<128x128xf32, #tpu.memory_space<vmem>>, vector<128x128xf32>
    %c0_10 = arith.constant 0 : index
    %c0_11 = arith.constant 0 : index
    %c0_12 = arith.constant 0 : index
    %15 = vector.load %arg1[%c0_10, %c0_11, %c0_12] : memref<8x64x128xf32, #tpu.memory_space<vmem>>, vector<1x64x128xf32>
    %16 = vector.shape_cast %15 : vector<1x64x128xf32> to vector<64x128xf32>
    %cst_13 = arith.constant dense<0.000000e+00> : vector<64x128xf32>
    %17 = tpu.matmul %16, %14, %cst_13 {dimension_numbers = #tpu.dot_dimension_numbers<[1], [0], [0], [1], [0, 0, 1, 1], [], []>} : vector<64x128xf32>, vector<128x128xf32>, vector<64x128xf32> -> vector<64x128xf32>
    %18 = vector.extract_strided_slice %17 {offsets = [0, 0], sizes = [32, 128], strides = [1, 1]} : vector<64x128xf32> to vector<32x128xf32>
    %19 = vector.extract_strided_slice %17 {offsets = [32, 0], sizes = [32, 128], strides = [1, 1]} : vector<64x128xf32> to vector<32x128xf32>
    %20 = math.exp %18 : vector<32x128xf32>
    %cst_14 = arith.constant 0.000000e+00 : f32
    %21 = vector.broadcast %cst_14 : f32 to vector<32x128xf32>
    %22 = arith.cmpf ogt, %18, %21 : vector<32x128xf32>
    %cst_15 = arith.constant 1.000000e+00 : f32
    %23 = vector.broadcast %cst_15 : f32 to vector<32x128xf32>
    %24 = arith.subf %20, %23 : vector<32x128xf32>
    %cst_16 = arith.constant 1.67326319 : f32
    %25 = vector.broadcast %cst_16 : f32 to vector<32x128xf32>
    %26 = arith.mulf %25, %24 : vector<32x128xf32>
    %27 = arith.select %22, %18, %26 : vector<32x128xi1>, vector<32x128xf32>
    %cst_17 = arith.constant 1.05070102 : f32
    %28 = vector.broadcast %cst_17 : f32 to vector<32x128xf32>
    %29 = arith.mulf %28, %27 : vector<32x128xf32>
    %cst_18 = arith.constant 0.000000e+00 : f32
    %30 = vector.broadcast %cst_18 : f32 to vector<32x128xf32>
    %31 = arith.cmpf ogt, %18, %30 : vector<32x128xf32>
    %cst_19 = arith.constant 1.000000e+00 : f32
    %32 = vector.broadcast %cst_19 : f32 to vector<32x128xf32>
    %cst_20 = arith.constant 1.67326319 : f32
    %33 = vector.broadcast %cst_20 : f32 to vector<32x128xf32>
    %34 = arith.mulf %33, %20 : vector<32x128xf32>
    %35 = arith.select %31, %32, %34 : vector<32x128xi1>, vector<32x128xf32>
    %cst_21 = arith.constant 1.05070102 : f32
    %36 = vector.broadcast %cst_21 : f32 to vector<32x128xf32>
    %37 = arith.mulf %36, %35 : vector<32x128xf32>
    %38 = arith.mulf %19, %37 : vector<32x128xf32>
    %39 = arith.mulf %38, %37 : vector<32x128xf32>
    %c0_22 = arith.constant 0 : index
    %c0_23 = arith.constant 0 : index
    %40 = vector.load %arg4[%c0_22, %c0_23] : memref<128x128xf32, #tpu.memory_space<vmem>>, vector<32x128xf32>
    tpu.vector_store %arg4[%c0_22, %c0_23], %29 {strides = array<i32>} : memref<128x128xf32, #tpu.memory_space<vmem>>, vector<32x128xf32>,
    %41 = arith.mulf %29, %29 : vector<32x128xf32>
    %42 = arith.addf %41, %39 : vector<32x128xf32>
    %c32_24 = arith.constant 32 : index
    %c0_25 = arith.constant 0 : index
    %43 = vector.load %arg4[%c32_24, %c0_25] : memref<128x128xf32, #tpu.memory_space<vmem>>, vector<32x128xf32>
    tpu.vector_store %arg4[%c32_24, %c0_25], %42 {strides = array<i32>} : memref<128x128xf32, #tpu.memory_space<vmem>>, vector<32x128xf32>,
    %c64_26 = arith.constant 64 : index
    %c0_27 = arith.constant 0 : index
    %44 = vector.load %arg4[%c64_26, %c0_27] : memref<128x128xf32, #tpu.memory_space<vmem>>, vector<32x128xf32>
    tpu.vector_store %arg4[%c64_26, %c0_27], %39 {strides = array<i32>} : memref<128x128xf32, #tpu.memory_space<vmem>>, vector<32x128xf32>,
    %c0_28 = arith.constant 0 : index
    %c0_29 = arith.constant 0 : index
    %45 = vector.load %arg4[%c0_28, %c0_29] : memref<128x128xf32, #tpu.memory_space<vmem>>, vector<128x128xf32>
    %c1 = arith.constant 1 : index
    %c0_30 = arith.constant 0 : index
    %c0_31 = arith.constant 0 : index
    %46 = vector.load %arg1[%c1, %c0_30, %c0_31] : memref<8x64x128xf32, #tpu.memory_space<vmem>>, vector<1x64x128xf32>
    %47 = vector.shape_cast %46 : vector<1x64x128xf32> to vector<64x128xf32>
    %cst_32 = arith.constant dense<0.000000e+00> : vector<64x128xf32>
    %48 = tpu.matmul %47, %45, %cst_32 {dimension_numbers = #tpu.dot_dimension_numbers<[1], [0], [0], [1], [0, 0, 1, 1], [], []>} : vector<64x128xf32>, vector<128x128xf32>, vector<64x128xf32> -> vector<64x128xf32>
    %49 = vector.extract_strided_slice %48 {offsets = [0, 0], sizes = [32, 128], strides = [1, 1]} : vector<64x128xf32> to vector<32x128xf32>
    %50 = vector.extract_strided_slice %48 {offsets = [32, 0], sizes = [32, 128], strides = [1, 1]} : vector<64x128xf32> to vector<32x128xf32>
    %51 = math.exp %49 : vector<32x128xf32>
    %cst_33 = arith.constant 0.000000e+00 : f32
    %52 = vector.broadcast %cst_33 : f32 to vector<32x128xf32>
    %53 = arith.cmpf ogt, %49, %52 : vector<32x128xf32>
    %cst_34 = arith.constant 1.000000e+00 : f32
    %54 = vector.broadcast %cst_34 : f32 to vector<32x128xf32>
    %55 = arith.subf %51, %54 : vector<32x128xf32>
    %cst_35 = arith.constant 1.67326319 : f32
    %56 = vector.broadcast %cst_35 : f32 to vector<32x128xf32>
    %57 = arith.mulf %56, %55 : vector<32x128xf32>
    %58 = arith.select %53, %49, %57 : vector<32x128xi1>, vector<32x128xf32>
    %cst_36 = arith.constant 1.05070102 : f32
    %59 = vector.broadcast %cst_36 : f32 to vector<32x128xf32>
    %60 = arith.mulf %59, %58 : vector<32x128xf32>
    %cst_37 = arith.constant 0.000000e+00 : f32
    %61 = vector.broadcast %cst_37 : f32 to vector<32x128xf32>
    %62 = arith.cmpf ogt, %49, %61 : vector<32x128xf32>
    %cst_38 = arith.constant 1.000000e+00 : f32
    %63 = vector.broadcast %cst_38 : f32 to vector<32x128xf32>
    %cst_39 = arith.constant 1.67326319 : f32
    %64 = vector.broadcast %cst_39 : f32 to vector<32x128xf32>
    %65 = arith.mulf %64, %51 : vector<32x128xf32>
    %66 = arith.select %62, %63, %65 : vector<32x128xi1>, vector<32x128xf32>
    %cst_40 = arith.constant 1.05070102 : f32
    %67 = vector.broadcast %cst_40 : f32 to vector<32x128xf32>
    %68 = arith.mulf %67, %66 : vector<32x128xf32>
    %69 = arith.mulf %50, %68 : vector<32x128xf32>
    %70 = arith.mulf %69, %68 : vector<32x128xf32>
    %c0_41 = arith.constant 0 : index
    %c0_42 = arith.constant 0 : index
    %71 = vector.load %arg4[%c0_41, %c0_42] : memref<128x128xf32, #tpu.memory_space<vmem>>, vector<32x128xf32>
    tpu.vector_store %arg4[%c0_41, %c0_42], %60 {strides = array<i32>} : memref<128x128xf32, #tpu.memory_space<vmem>>, vector<32x128xf32>,
    %72 = arith.mulf %60, %60 : vector<32x128xf32>
    %73 = arith.addf %72, %70 : vector<32x128xf32>
    %c32_43 = arith.constant 32 : index
    %c0_44 = arith.constant 0 : index
    %74 = vector.load %arg4[%c32_43, %c0_44] : memref<128x128xf32, #tpu.memory_space<vmem>>, vector<32x128xf32>
    tpu.vector_store %arg4[%c32_43, %c0_44], %73 {strides = array<i32>} : memref<128x128xf32, #tpu.memory_space<vmem>>, vector<32x128xf32>,
    %c64_45 = arith.constant 64 : index
    %c0_46 = arith.constant 0 : index
    %75 = vector.load %arg4[%c64_45, %c0_46] : memref<128x128xf32, #tpu.memory_space<vmem>>, vector<32x128xf32>
    tpu.vector_store %arg4[%c64_45, %c0_46], %70 {strides = array<i32>} : memref<128x128xf32, #tpu.memory_space<vmem>>, vector<32x128xf32>,
    %c0_47 = arith.constant 0 : index
    %c0_48 = arith.constant 0 : index
    %76 = vector.load %arg4[%c0_47, %c0_48] : memref<128x128xf32, #tpu.memory_space<vmem>>, vector<128x128xf32>
    %c2 = arith.constant 2 : index
    %c0_49 = arith.constant 0 : index
    %c0_50 = arith.constant 0 : index
    %77 = vector.load %arg1[%c2, %c0_49, %c0_50] : memref<8x64x128xf32, #tpu.memory_space<vmem>>, vector<1x64x128xf32>
    %78 = vector.shape_cast %77 : vector<1x64x128xf32> to vector<64x128xf32>
    %cst_51 = arith.constant dense<0.000000e+00> : vector<64x128xf32>
    %79 = tpu.matmul %78, %76, %cst_51 {dimension_numbers = #tpu.dot_dimension_numbers<[1], [0], [0], [1], [0, 0, 1, 1], [], []>} : vector<64x128xf32>, vector<128x128xf32>, vector<64x128xf32> -> vector<64x128xf32>
    %80 = vector.extract_strided_slice %79 {offsets = [0, 0], sizes = [32, 128], strides = [1, 1]} : vector<64x128xf32> to vector<32x128xf32>
    %81 = vector.extract_strided_slice %79 {offsets = [32, 0], sizes = [32, 128], strides = [1, 1]} : vector<64x128xf32> to vector<32x128xf32>
    %82 = math.exp %80 : vector<32x128xf32>
    %cst_52 = arith.constant 0.000000e+00 : f32
    %83 = vector.broadcast %cst_52 : f32 to vector<32x128xf32>
    %84 = arith.cmpf ogt, %80, %83 : vector<32x128xf32>
    %cst_53 = arith.constant 1.000000e+00 : f32
    %85 = vector.broadcast %cst_53 : f32 to vector<32x128xf32>
    %86 = arith.subf %82, %85 : vector<32x128xf32>
    %cst_54 = arith.constant 1.67326319 : f32
    %87 = vector.broadcast %cst_54 : f32 to vector<32x128xf32>
    %88 = arith.mulf %87, %86 : vector<32x128xf32>
    %89 = arith.select %84, %80, %88 : vector<32x128xi1>, vector<32x128xf32>
    %cst_55 = arith.constant 1.05070102 : f32
    %90 = vector.broadcast %cst_55 : f32 to vector<32x128xf32>
    %91 = arith.mulf %90, %89 : vector<32x128xf32>
    %cst_56 = arith.constant 0.000000e+00 : f32
    %92 = vector.broadcast %cst_56 : f32 to vector<32x128xf32>
    %93 = arith.cmpf ogt, %80, %92 : vector<32x128xf32>
    %cst_57 = arith.constant 1.000000e+00 : f32
    %94 = vector.broadcast %cst_57 : f32 to vector<32x128xf32>
    %cst_58 = arith.constant 1.67326319 : f32
    %95 = vector.broadcast %cst_58 : f32 to vector<32x128xf32>
    %96 = arith.mulf %95, %82 : vector<32x128xf32>
    %97 = arith.select %93, %94, %96 : vector<32x128xi1>, vector<32x128xf32>
    %cst_59 = arith.constant 1.05070102 : f32
    %98 = vector.broadcast %cst_59 : f32 to vector<32x128xf32>
    %99 = arith.mulf %98, %97 : vector<32x128xf32>
    %100 = arith.mulf %81, %99 : vector<32x128xf32>
    %101 = arith.mulf %100, %99 : vector<32x128xf32>
    %c0_60 = arith.constant 0 : index
    %c0_61 = arith.constant 0 : index
    %102 = vector.load %arg4[%c0_60, %c0_61] : memref<128x128xf32, #tpu.memory_space<vmem>>, vector<32x128xf32>
    tpu.vector_store %arg4[%c0_60, %c0_61], %91 {strides = array<i32>} : memref<128x128xf32, #tpu.memory_space<vmem>>, vector<32x128xf32>,
    %103 = arith.mulf %91, %91 : vector<32x128xf32>
    %104 = arith.addf %103, %101 : vector<32x128xf32>
    %c32_62 = arith.constant 32 : index
    %c0_63 = arith.constant 0 : index
    %105 = vector.load %arg4[%c32_62, %c0_63] : memref<128x128xf32, #tpu.memory_space<vmem>>, vector<32x128xf32>
    tpu.vector_store %arg4[%c32_62, %c0_63], %104 {strides = array<i32>} : memref<128x128xf32, #tpu.memory_space<vmem>>, vector<32x128xf32>,
    %c64_64 = arith.constant 64 : index
    %c0_65 = arith.constant 0 : index
    %106 = vector.load %arg4[%c64_64, %c0_65] : memref<128x128xf32, #tpu.memory_space<vmem>>, vector<32x128xf32>
    tpu.vector_store %arg4[%c64_64, %c0_65], %101 {strides = array<i32>} : memref<128x128xf32, #tpu.memory_space<vmem>>, vector<32x128xf32>,
    %c0_66 = arith.constant 0 : index
    %c0_67 = arith.constant 0 : index
    %107 = vector.load %arg4[%c0_66, %c0_67] : memref<128x128xf32, #tpu.memory_space<vmem>>, vector<128x128xf32>
    %c3 = arith.constant 3 : index
    %c0_68 = arith.constant 0 : index
    %c0_69 = arith.constant 0 : index
    %108 = vector.load %arg1[%c3, %c0_68, %c0_69] : memref<8x64x128xf32, #tpu.memory_space<vmem>>, vector<1x64x128xf32>
    %109 = vector.shape_cast %108 : vector<1x64x128xf32> to vector<64x128xf32>
    %cst_70 = arith.constant dense<0.000000e+00> : vector<64x128xf32>
    %110 = tpu.matmul %109, %107, %cst_70 {dimension_numbers = #tpu.dot_dimension_numbers<[1], [0], [0], [1], [0, 0, 1, 1], [], []>} : vector<64x128xf32>, vector<128x128xf32>, vector<64x128xf32> -> vector<64x128xf32>
    %111 = vector.extract_strided_slice %110 {offsets = [0, 0], sizes = [32, 128], strides = [1, 1]} : vector<64x128xf32> to vector<32x128xf32>
    %112 = vector.extract_strided_slice %110 {offsets = [32, 0], sizes = [32, 128], strides = [1, 1]} : vector<64x128xf32> to vector<32x128xf32>
    %113 = math.exp %111 : vector<32x128xf32>
    %cst_71 = arith.constant 0.000000e+00 : f32
    %114 = vector.broadcast %cst_71 : f32 to vector<32x128xf32>
    %115 = arith.cmpf ogt, %111, %114 : vector<32x128xf32>
    %cst_72 = arith.constant 1.000000e+00 : f32
    %116 = vector.broadcast %cst_72 : f32 to vector<32x128xf32>
    %117 = arith.subf %113, %116 : vector<32x128xf32>
    %cst_73 = arith.constant 1.67326319 : f32
    %118 = vector.broadcast %cst_73 : f32 to vector<32x128xf32>
    %119 = arith.mulf %118, %117 : vector<32x128xf32>
    %120 = arith.select %115, %111, %119 : vector<32x128xi1>, vector<32x128xf32>
    %cst_74 = arith.constant 1.05070102 : f32
    %121 = vector.broadcast %cst_74 : f32 to vector<32x128xf32>
    %122 = arith.mulf %121, %120 : vector<32x128xf32>
    %cst_75 = arith.constant 0.000000e+00 : f32
    %123 = vector.broadcast %cst_75 : f32 to vector<32x128xf32>
    %124 = arith.cmpf ogt, %111, %123 : vector<32x128xf32>
    %cst_76 = arith.constant 1.000000e+00 : f32
    %125 = vector.broadcast %cst_76 : f32 to vector<32x128xf32>
    %cst_77 = arith.constant 1.67326319 : f32
    %126 = vector.broadcast %cst_77 : f32 to vector<32x128xf32>
    %127 = arith.mulf %126, %113 : vector<32x128xf32>
    %128 = arith.select %124, %125, %127 : vector<32x128xi1>, vector<32x128xf32>
    %cst_78 = arith.constant 1.05070102 : f32
    %129 = vector.broadcast %cst_78 : f32 to vector<32x128xf32>
    %130 = arith.mulf %129, %128 : vector<32x128xf32>
    %131 = arith.mulf %112, %130 : vector<32x128xf32>
    %132 = arith.mulf %131, %130 : vector<32x128xf32>
    %c0_79 = arith.constant 0 : index
    %c0_80 = arith.constant 0 : index
    %133 = vector.load %arg4[%c0_79, %c0_80] : memref<128x128xf32, #tpu.memory_space<vmem>>, vector<32x128xf32>
    tpu.vector_store %arg4[%c0_79, %c0_80], %122 {strides = array<i32>} : memref<128x128xf32, #tpu.memory_space<vmem>>, vector<32x128xf32>,
    %134 = arith.mulf %122, %122 : vector<32x128xf32>
    %135 = arith.addf %134, %132 : vector<32x128xf32>
    %c32_81 = arith.constant 32 : index
    %c0_82 = arith.constant 0 : index
    %136 = vector.load %arg4[%c32_81, %c0_82] : memref<128x128xf32, #tpu.memory_space<vmem>>, vector<32x128xf32>
    tpu.vector_store %arg4[%c32_81, %c0_82], %135 {strides = array<i32>} : memref<128x128xf32, #tpu.memory_space<vmem>>, vector<32x128xf32>,
    %c64_83 = arith.constant 64 : index
    %c0_84 = arith.constant 0 : index
    %137 = vector.load %arg4[%c64_83, %c0_84] : memref<128x128xf32, #tpu.memory_space<vmem>>, vector<32x128xf32>
    tpu.vector_store %arg4[%c64_83, %c0_84], %132 {strides = array<i32>} : memref<128x128xf32, #tpu.memory_space<vmem>>, vector<32x128xf32>,
    %c0_85 = arith.constant 0 : index
    %c0_86 = arith.constant 0 : index
    %138 = vector.load %arg4[%c0_85, %c0_86] : memref<128x128xf32, #tpu.memory_space<vmem>>, vector<128x128xf32>
    %c4 = arith.constant 4 : index
    %c0_87 = arith.constant 0 : index
    %c0_88 = arith.constant 0 : index
    %139 = vector.load %arg1[%c4, %c0_87, %c0_88] : memref<8x64x128xf32, #tpu.memory_space<vmem>>, vector<1x64x128xf32>
    %140 = vector.shape_cast %139 : vector<1x64x128xf32> to vector<64x128xf32>
    %cst_89 = arith.constant dense<0.000000e+00> : vector<64x128xf32>
    %141 = tpu.matmul %140, %138, %cst_89 {dimension_numbers = #tpu.dot_dimension_numbers<[1], [0], [0], [1], [0, 0, 1, 1], [], []>} : vector<64x128xf32>, vector<128x128xf32>, vector<64x128xf32> -> vector<64x128xf32>
    %142 = vector.extract_strided_slice %141 {offsets = [0, 0], sizes = [32, 128], strides = [1, 1]} : vector<64x128xf32> to vector<32x128xf32>
    %143 = vector.extract_strided_slice %141 {offsets = [32, 0], sizes = [32, 128], strides = [1, 1]} : vector<64x128xf32> to vector<32x128xf32>
    %144 = math.exp %142 : vector<32x128xf32>
    %cst_90 = arith.constant 0.000000e+00 : f32
    %145 = vector.broadcast %cst_90 : f32 to vector<32x128xf32>
    %146 = arith.cmpf ogt, %142, %145 : vector<32x128xf32>
    %cst_91 = arith.constant 1.000000e+00 : f32
    %147 = vector.broadcast %cst_91 : f32 to vector<32x128xf32>
    %148 = arith.subf %144, %147 : vector<32x128xf32>
    %cst_92 = arith.constant 1.67326319 : f32
    %149 = vector.broadcast %cst_92 : f32 to vector<32x128xf32>
    %150 = arith.mulf %149, %148 : vector<32x128xf32>
    %151 = arith.select %146, %142, %150 : vector<32x128xi1>, vector<32x128xf32>
    %cst_93 = arith.constant 1.05070102 : f32
    %152 = vector.broadcast %cst_93 : f32 to vector<32x128xf32>
    %153 = arith.mulf %152, %151 : vector<32x128xf32>
    %cst_94 = arith.constant 0.000000e+00 : f32
    %154 = vector.broadcast %cst_94 : f32 to vector<32x128xf32>
    %155 = arith.cmpf ogt, %142, %154 : vector<32x128xf32>
    %cst_95 = arith.constant 1.000000e+00 : f32
    %156 = vector.broadcast %cst_95 : f32 to vector<32x128xf32>
    %cst_96 = arith.constant 1.67326319 : f32
    %157 = vector.broadcast %cst_96 : f32 to vector<32x128xf32>
    %158 = arith.mulf %157, %144 : vector<32x128xf32>
    %159 = arith.select %155, %156, %158 : vector<32x128xi1>, vector<32x128xf32>
    %cst_97 = arith.constant 1.05070102 : f32
    %160 = vector.broadcast %cst_97 : f32 to vector<32x128xf32>
    %161 = arith.mulf %160, %159 : vector<32x128xf32>
    %162 = arith.mulf %143, %161 : vector<32x128xf32>
    %163 = arith.mulf %162, %161 : vector<32x128xf32>
    %c0_98 = arith.constant 0 : index
    %c0_99 = arith.constant 0 : index
    %164 = vector.load %arg4[%c0_98, %c0_99] : memref<128x128xf32, #tpu.memory_space<vmem>>, vector<32x128xf32>
    tpu.vector_store %arg4[%c0_98, %c0_99], %153 {strides = array<i32>} : memref<128x128xf32, #tpu.memory_space<vmem>>, vector<32x128xf32>,
    %165 = arith.mulf %153, %153 : vector<32x128xf32>
    %166 = arith.addf %165, %163 : vector<32x128xf32>
    %c32_100 = arith.constant 32 : index
    %c0_101 = arith.constant 0 : index
    %167 = vector.load %arg4[%c32_100, %c0_101] : memref<128x128xf32, #tpu.memory_space<vmem>>, vector<32x128xf32>
    tpu.vector_store %arg4[%c32_100, %c0_101], %166 {strides = array<i32>} : memref<128x128xf32, #tpu.memory_space<vmem>>, vector<32x128xf32>,
    %c64_102 = arith.constant 64 : index
    %c0_103 = arith.constant 0 : index
    %168 = vector.load %arg4[%c64_102, %c0_103] : memref<128x128xf32, #tpu.memory_space<vmem>>, vector<32x128xf32>
    tpu.vector_store %arg4[%c64_102, %c0_103], %163 {strides = array<i32>} : memref<128x128xf32, #tpu.memory_space<vmem>>, vector<32x128xf32>,
    %c0_104 = arith.constant 0 : index
    %c0_105 = arith.constant 0 : index
    %169 = vector.load %arg4[%c0_104, %c0_105] : memref<128x128xf32, #tpu.memory_space<vmem>>, vector<128x128xf32>
    %c5 = arith.constant 5 : index
    %c0_106 = arith.constant 0 : index
    %c0_107 = arith.constant 0 : index
    %170 = vector.load %arg1[%c5, %c0_106, %c0_107] : memref<8x64x128xf32, #tpu.memory_space<vmem>>, vector<1x64x128xf32>
    %171 = vector.shape_cast %170 : vector<1x64x128xf32> to vector<64x128xf32>
    %cst_108 = arith.constant dense<0.000000e+00> : vector<64x128xf32>
    %172 = tpu.matmul %171, %169, %cst_108 {dimension_numbers = #tpu.dot_dimension_numbers<[1], [0], [0], [1], [0, 0, 1, 1], [], []>} : vector<64x128xf32>, vector<128x128xf32>, vector<64x128xf32> -> vector<64x128xf32>
    %173 = vector.extract_strided_slice %172 {offsets = [0, 0], sizes = [32, 128], strides = [1, 1]} : vector<64x128xf32> to vector<32x128xf32>
    %174 = vector.extract_strided_slice %172 {offsets = [32, 0], sizes = [32, 128], strides = [1, 1]} : vector<64x128xf32> to vector<32x128xf32>
    %175 = math.exp %173 : vector<32x128xf32>
    %cst_109 = arith.constant 0.000000e+00 : f32
    %176 = vector.broadcast %cst_109 : f32 to vector<32x128xf32>
    %177 = arith.cmpf ogt, %173, %176 : vector<32x128xf32>
    %cst_110 = arith.constant 1.000000e+00 : f32
    %178 = vector.broadcast %cst_110 : f32 to vector<32x128xf32>
    %179 = arith.subf %175, %178 : vector<32x128xf32>
    %cst_111 = arith.constant 1.67326319 : f32
    %180 = vector.broadcast %cst_111 : f32 to vector<32x128xf32>
    %181 = arith.mulf %180, %179 : vector<32x128xf32>
    %182 = arith.select %177, %173, %181 : vector<32x128xi1>, vector<32x128xf32>
    %cst_112 = arith.constant 1.05070102 : f32
    %183 = vector.broadcast %cst_112 : f32 to vector<32x128xf32>
    %184 = arith.mulf %183, %182 : vector<32x128xf32>
    %cst_113 = arith.constant 0.000000e+00 : f32
    %185 = vector.broadcast %cst_113 : f32 to vector<32x128xf32>
    %186 = arith.cmpf ogt, %173, %185 : vector<32x128xf32>
    %cst_114 = arith.constant 1.000000e+00 : f32
    %187 = vector.broadcast %cst_114 : f32 to vector<32x128xf32>
    %cst_115 = arith.constant 1.67326319 : f32
    %188 = vector.broadcast %cst_115 : f32 to vector<32x128xf32>
    %189 = arith.mulf %188, %175 : vector<32x128xf32>
    %190 = arith.select %186, %187, %189 : vector<32x128xi1>, vector<32x128xf32>
    %cst_116 = arith.constant 1.05070102 : f32
    %191 = vector.broadcast %cst_116 : f32 to vector<32x128xf32>
    %192 = arith.mulf %191, %190 : vector<32x128xf32>
    %193 = arith.mulf %174, %192 : vector<32x128xf32>
    %194 = arith.mulf %193, %192 : vector<32x128xf32>
    %c0_117 = arith.constant 0 : index
    %c0_118 = arith.constant 0 : index
    %195 = vector.load %arg4[%c0_117, %c0_118] : memref<128x128xf32, #tpu.memory_space<vmem>>, vector<32x128xf32>
    tpu.vector_store %arg4[%c0_117, %c0_118], %184 {strides = array<i32>} : memref<128x128xf32, #tpu.memory_space<vmem>>, vector<32x128xf32>,
    %196 = arith.mulf %184, %184 : vector<32x128xf32>
    %197 = arith.addf %196, %194 : vector<32x128xf32>
    %c32_119 = arith.constant 32 : index
    %c0_120 = arith.constant 0 : index
    %198 = vector.load %arg4[%c32_119, %c0_120] : memref<128x128xf32, #tpu.memory_space<vmem>>, vector<32x128xf32>
    tpu.vector_store %arg4[%c32_119, %c0_120], %197 {strides = array<i32>} : memref<128x128xf32, #tpu.memory_space<vmem>>, vector<32x128xf32>,
    %c64_121 = arith.constant 64 : index
    %c0_122 = arith.constant 0 : index
    %199 = vector.load %arg4[%c64_121, %c0_122] : memref<128x128xf32, #tpu.memory_space<vmem>>, vector<32x128xf32>
    tpu.vector_store %arg4[%c64_121, %c0_122], %194 {strides = array<i32>} : memref<128x128xf32, #tpu.memory_space<vmem>>, vector<32x128xf32>,
    %c0_123 = arith.constant 0 : index
    %c0_124 = arith.constant 0 : index
    %200 = vector.load %arg4[%c0_123, %c0_124] : memref<128x128xf32, #tpu.memory_space<vmem>>, vector<128x128xf32>
    %c6 = arith.constant 6 : index
    %c0_125 = arith.constant 0 : index
    %c0_126 = arith.constant 0 : index
    %201 = vector.load %arg1[%c6, %c0_125, %c0_126] : memref<8x64x128xf32, #tpu.memory_space<vmem>>, vector<1x64x128xf32>
    %202 = vector.shape_cast %201 : vector<1x64x128xf32> to vector<64x128xf32>
    %cst_127 = arith.constant dense<0.000000e+00> : vector<64x128xf32>
    %203 = tpu.matmul %202, %200, %cst_127 {dimension_numbers = #tpu.dot_dimension_numbers<[1], [0], [0], [1], [0, 0, 1, 1], [], []>} : vector<64x128xf32>, vector<128x128xf32>, vector<64x128xf32> -> vector<64x128xf32>
    %204 = vector.extract_strided_slice %203 {offsets = [0, 0], sizes = [32, 128], strides = [1, 1]} : vector<64x128xf32> to vector<32x128xf32>
    %205 = vector.extract_strided_slice %203 {offsets = [32, 0], sizes = [32, 128], strides = [1, 1]} : vector<64x128xf32> to vector<32x128xf32>
    %206 = math.exp %204 : vector<32x128xf32>
    %cst_128 = arith.constant 0.000000e+00 : f32
    %207 = vector.broadcast %cst_128 : f32 to vector<32x128xf32>
    %208 = arith.cmpf ogt, %204, %207 : vector<32x128xf32>
    %cst_129 = arith.constant 1.000000e+00 : f32
    %209 = vector.broadcast %cst_129 : f32 to vector<32x128xf32>
    %210 = arith.subf %206, %209 : vector<32x128xf32>
    %cst_130 = arith.constant 1.67326319 : f32
    %211 = vector.broadcast %cst_130 : f32 to vector<32x128xf32>
    %212 = arith.mulf %211, %210 : vector<32x128xf32>
    %213 = arith.select %208, %204, %212 : vector<32x128xi1>, vector<32x128xf32>
    %cst_131 = arith.constant 1.05070102 : f32
    %214 = vector.broadcast %cst_131 : f32 to vector<32x128xf32>
    %215 = arith.mulf %214, %213 : vector<32x128xf32>
    %cst_132 = arith.constant 0.000000e+00 : f32
    %216 = vector.broadcast %cst_132 : f32 to vector<32x128xf32>
    %217 = arith.cmpf ogt, %204, %216 : vector<32x128xf32>
    %cst_133 = arith.constant 1.000000e+00 : f32
    %218 = vector.broadcast %cst_133 : f32 to vector<32x128xf32>
    %cst_134 = arith.constant 1.67326319 : f32
    %219 = vector.broadcast %cst_134 : f32 to vector<32x128xf32>
    %220 = arith.mulf %219, %206 : vector<32x128xf32>
    %221 = arith.select %217, %218, %220 : vector<32x128xi1>, vector<32x128xf32>
    %cst_135 = arith.constant 1.05070102 : f32
    %222 = vector.broadcast %cst_135 : f32 to vector<32x128xf32>
    %223 = arith.mulf %222, %221 : vector<32x128xf32>
    %224 = arith.mulf %205, %223 : vector<32x128xf32>
    %225 = arith.mulf %224, %223 : vector<32x128xf32>
    %c0_136 = arith.constant 0 : index
    %c0_137 = arith.constant 0 : index
    %226 = vector.load %arg4[%c0_136, %c0_137] : memref<128x128xf32, #tpu.memory_space<vmem>>, vector<32x128xf32>
    tpu.vector_store %arg4[%c0_136, %c0_137], %215 {strides = array<i32>} : memref<128x128xf32, #tpu.memory_space<vmem>>, vector<32x128xf32>,
    %227 = arith.mulf %215, %215 : vector<32x128xf32>
    %228 = arith.addf %227, %225 : vector<32x128xf32>
    %c32_138 = arith.constant 32 : index
    %c0_139 = arith.constant 0 : index
    %229 = vector.load %arg4[%c32_138, %c0_139] : memref<128x128xf32, #tpu.memory_space<vmem>>, vector<32x128xf32>
    tpu.vector_store %arg4[%c32_138, %c0_139], %228 {strides = array<i32>} : memref<128x128xf32, #tpu.memory_space<vmem>>, vector<32x128xf32>,
    %c64_140 = arith.constant 64 : index
    %c0_141 = arith.constant 0 : index
    %230 = vector.load %arg4[%c64_140, %c0_141] : memref<128x128xf32, #tpu.memory_space<vmem>>, vector<32x128xf32>
    tpu.vector_store %arg4[%c64_140, %c0_141], %225 {strides = array<i32>} : memref<128x128xf32, #tpu.memory_space<vmem>>, vector<32x128xf32>,
    %c0_142 = arith.constant 0 : index
    %c0_143 = arith.constant 0 : index
    %231 = vector.load %arg4[%c0_142, %c0_143] : memref<128x128xf32, #tpu.memory_space<vmem>>, vector<128x128xf32>
    %c7 = arith.constant 7 : index
    %c0_144 = arith.constant 0 : index
    %c0_145 = arith.constant 0 : index
    %232 = vector.load %arg1[%c7, %c0_144, %c0_145] : memref<8x64x128xf32, #tpu.memory_space<vmem>>, vector<1x64x128xf32>
    %233 = vector.shape_cast %232 : vector<1x64x128xf32> to vector<64x128xf32>
    %cst_146 = arith.constant dense<0.000000e+00> : vector<64x128xf32>
    %234 = tpu.matmul %233, %231, %cst_146 {dimension_numbers = #tpu.dot_dimension_numbers<[1], [0], [0], [1], [0, 0, 1, 1], [], []>} : vector<64x128xf32>, vector<128x128xf32>, vector<64x128xf32> -> vector<64x128xf32>
    %235 = vector.extract_strided_slice %234 {offsets = [0, 0], sizes = [32, 128], strides = [1, 1]} : vector<64x128xf32> to vector<32x128xf32>
    %236 = vector.extract_strided_slice %234 {offsets = [32, 0], sizes = [32, 128], strides = [1, 1]} : vector<64x128xf32> to vector<32x128xf32>
    %237 = tpu.iota {dimensions = array<i32: 0>} : vector<32x128xi32>
    %c3_i32 = arith.constant 3 : i32
    %238 = vector.broadcast %c3_i32 : i32 to vector<32x128xi32>
    %239 = arith.cmpi slt, %237, %238 : vector<32x128xi32>
    %cst_147 = arith.constant -1.000000e+30 : f32
    %240 = vector.broadcast %cst_147 : f32 to vector<32x128xf32>
    %241 = arith.select %239, %235, %240 : vector<32x128xi1>, vector<32x128xf32>
    %cst_148 = arith.constant dense<0xFF800000> : vector<128xf32>
    %242 = vector.multi_reduction <maximumf>, %241, %cst_148 [0] : vector<32x128xf32> to vector<128xf32>
    %243 = vector.shape_cast %242 : vector<128xf32> to vector<1x128xf32>
    %244 = vector.broadcast %243 : vector<1x128xf32> to vector<32x128xf32>
    %245 = arith.subf %241, %244 : vector<32x128xf32>
    %246 = math.exp %245 : vector<32x128xf32>
    %cst_149 = arith.constant 0.000000e+00 : f32
    %247 = vector.broadcast %cst_149 : f32 to vector<32x128xf32>
    %248 = arith.select %239, %246, %247 : vector<32x128xi1>, vector<32x128xf32>
    %cst_150 = arith.constant dense<0.000000e+00> : vector<128xf32>
    %249 = vector.multi_reduction <add>, %248, %cst_150 [0] : vector<32x128xf32> to vector<128xf32>
    %250 = vector.shape_cast %249 : vector<128xf32> to vector<1x128xf32>
    %251 = tpu.reciprocal %250 {approx = true} : vector<1x128xf32> -> vector<1x128xf32>
    %252 = arith.mulf %250, %251 : vector<1x128xf32>
    %cst_151 = arith.constant 2.000000e+00 : f32
    %253 = vector.broadcast %cst_151 : f32 to vector<1x128xf32>
    %254 = arith.subf %253, %252 : vector<1x128xf32>
    %255 = arith.mulf %251, %254 : vector<1x128xf32>
    %256 = vector.broadcast %255 : vector<1x128xf32> to vector<32x128xf32>
    %257 = arith.mulf %248, %256 : vector<32x128xf32>
    %cst_152 = arith.constant 1.000000e+00 : f32
    %258 = vector.broadcast %cst_152 : f32 to vector<32x128xf32>
    %259 = arith.subf %258, %257 : vector<32x128xf32>
    %260 = arith.mulf %257, %259 : vector<32x128xf32>
    %c0_153 = arith.constant 0 : index
    %c0_154 = arith.constant 0 : index
    %261 = vector.load %arg3[%c0_153, %c0_154] : memref<64x128xf32, #tpu.memory_space<vmem>>, vector<32x128xf32>
    tpu.vector_store %arg3[%c0_153, %c0_154], %257 {strides = array<i32>} : memref<64x128xf32, #tpu.memory_space<vmem>>, vector<32x128xf32>,
    %262 = arith.mulf %236, %260 : vector<32x128xf32>
    %263 = arith.mulf %262, %260 : vector<32x128xf32>
    %c32_155 = arith.constant 32 : index
    %c0_156 = arith.constant 0 : index
    %264 = vector.load %arg3[%c32_155, %c0_156] : memref<64x128xf32, #tpu.memory_space<vmem>>, vector<32x128xf32>
    tpu.vector_store %arg3[%c32_155, %c0_156], %263 {strides = array<i32>} : memref<64x128xf32, #tpu.memory_space<vmem>>, vector<32x128xf32>,
    return
  }
  func.func @transform_0(%arg0: i32) -> (i32, i32, i32) {
    %c0_i32 = arith.constant 0 : i32
    %c0_i32_0 = arith.constant 0 : i32
    %c0_i32_1 = arith.constant 0 : i32
    %c0_i32_2 = arith.constant 0 : i32
    return %c0_i32, %c0_i32_0, %c0_i32_1 : i32, i32, i32
  }
  func.func @transform_1(%arg0: i32) -> (i32, i32) {
    %c0_i32 = arith.constant 0 : i32
    %c0_i32_0 = arith.constant 0 : i32
    return %c0_i32, %arg0 : i32, i32
  }
  func.func @transform_2(%arg0: i32) -> (i32, i32) {
    %c0_i32 = arith.constant 0 : i32
    %c0_i32_0 = arith.constant 0 : i32
    return %c0_i32, %arg0 : i32, i32
  }
}

</mosaic_0001>

<llo_original>
// kernel: _lambda_.1
$region0: #{_lambda_.1}
  #allocation0 [shape = 'u32[]', space=smem, size = 0x4, offset = 0x4, fixed_abs, tag = 'smem constant byte address 0x4 - core index']
  #allocation1 [shape = 'u32[144,128]{1,0:T(1,128)}', space=vmem, size = 0x12000, scoped, tag = 'internal scratch']
  #allocation2 [shape = 'f32[128,128]{1,0:T(8,128)}', space=vmem, size = 0x10000, scoped, tag = 'scratch operand']
  %s0 = inlined_call_operand.hbm [shape: f32[8,64,128], index: 0, kind: input, shape index: {}]
  %s1 = inlined_call_operand.vmem [shape: f32[32,256], index: 1, kind: input, shape index: {}]
  %s2 = inlined_call_operand.vmem [shape: f32[64,256], index: 2, kind: output, shape index: {}]
  %s3 = sld [smem:[#allocation0]]
  $region117: #{_lambda_.1} parent=0
    _
  %s5 = ssub.s32 1, %s3
  %s6 = scalar_select 0, %s5, %s3
  $region1: #{_lambda_.1} parent=0
    #allocation3 [shape = 'u8[262144]{0}', space=vmem, size = 0x40000, scoped, tag = 'input window, operand 0, single buffered']
    #allocation4 [shape = 's32[2]{0}', space=sflag, size = 0x8, scoped, tag = 'scoped memory for _lambda_.1']
    #allocation5 [shape = 'u8[32768]{0}', space=vmem, size = 0x8000, scoped, tag = 'input window, operand 1']
    #allocation6 [shape = 'u8[65536]{0}', space=vmem, size = 0x10000, scoped, tag = 'output window, operand 0']
    %7 = vsyncpa [#allocation4], 0
    loop: start=0, step=1, limit=4
    $region2: #{_lambda_.1} parent=1 // loop_pre_header
      _
    $region3: #{_lambda_.1} parent=1 // loop_header
      %s9 = sphi 0, %s13
      %p10 = scmp.ge.s32.totalorder %s9, 4
      %s17 = sphi 0, %s17
      %s19 = sphi 0, %s17
      %s20 = sphi 0, %s19
      %s34 = sphi 0, %s20
      %s40 = sphi 0, %s42
      %s43 = sphi 0, %s40
      %s44 = sphi 0, %s43
      %s60 = sphi 0, %s44
      %s66 = sphi 0, %s68
      %s69 = sphi 0, %s66
      %s70 = sphi 0, %s69
      %s86 = sphi 0, %s70
    $region4: #{_lambda_.1} parent=1 // loop_header_branch
      %12 = sbr.rel (%p10) target = $region8
    $region5: #{_lambda_.1} parent=1 // loop_body
      %s14 = ssub.s32 %s9, 1
      %s15 = ssub.s32 %s9, 2
      %s16 = sadd.s32 %s9, 1
      %s18 = sadd.s32 %s17, 1
      %p21 = scmp.eq.s32.totalorder %s9, 1
      %p22 = scmp.ne.s32.totalorder %s17, %s19
      %p23 = scmp.eq.s32.totalorder %s9, 0
      %p24 = por %p22, %p23
      %p25 = scmp.ne.s32.totalorder %s17, %s19
      %p26 = scmp.eq.s32.totalorder %s14, 1
      %p27 = por %p25, %p26
      %p28 = scmp.ne.s32.totalorder %s19, %s20
      %p29 = scmp.eq.s32.totalorder %s14, 0
      %p30 = por %p28, %p29
      %p31 = scmp.ne.s32.totalorder %s19, %s20
      %p32 = scmp.eq.s32.totalorder %s15, 1
      %p33 = por %p31, %p32
      %p35 = scmp.ne.s32.totalorder %s20, %s34
      %p36 = scmp.eq.s32.totalorder %s15, 0
      %p37 = por %p35, %p36
      %s38 = ssub.s32 %s9, %s16
      %p39 = scmp.eq.s32.totalorder %s38, 0
      %s41 = sadd.s32 %s40, 1
      %s42 = scalar_select %p39, %s40, %s41
      %p45 = pneg %p39
      %p46 = scmp.eq.s32.totalorder %s9, 1
      %p47 = por %p45, %p46
      %p48 = scmp.ne.s32.totalorder %s40, %s43
      %p49 = scmp.eq.s32.totalorder %s9, 0
      %p50 = por %p48, %p49
      %p51 = scmp.ne.s32.totalorder %s40, %s43
      %p52 = scmp.eq.s32.totalorder %s14, 1
      %p53 = por %p51, %p52
      %p54 = scmp.ne.s32.totalorder %s43, %s44
      %p55 = scmp.eq.s32.totalorder %s14, 0
      %p56 = por %p54, %p55
      %p57 = scmp.ne.s32.totalorder %s43, %s44
      %p58 = scmp.eq.s32.totalorder %s15, 1
      %p59 = por %p57, %p58
      %p61 = scmp.ne.s32.totalorder %s44, %s60
      %p62 = scmp.eq.s32.totalorder %s15, 0
      %p63 = por %p61, %p62
      %s64 = ssub.s32 %s9, %s16
      %p65 = scmp.eq.s32.totalorder %s64, 0
      %s67 = sadd.s32 %s66, 1
      %s68 = scalar_select %p65, %s66, %s67
      %p71 = pneg %p65
      %p72 = scmp.eq.s32.totalorder %s9, 1
      %p73 = por %p71, %p72
      %p74 = scmp.ne.s32.totalorder %s66, %s69
      %p75 = scmp.eq.s32.totalorder %s9, 0
      %p76 = por %p74, %p75
      %p77 = scmp.ne.s32.totalorder %s66, %s69
      %p78 = scmp.eq.s32.totalorder %s14, 1
      %p79 = por %p77, %p78
      %p80 = scmp.ne.s32.totalorder %s69, %s70
      %p81 = scmp.eq.s32.totalorder %s14, 0
      %p82 = por %p80, %p81
      %p83 = scmp.ne.s32.totalorder %s69, %s70
      %p84 = scmp.eq.s32.totalorder %s15, 1
      %p85 = por %p83, %p84
      %p87 = scmp.ne.s32.totalorder %s70, %s86
      %p88 = scmp.eq.s32.totalorder %s15, 0
      %p89 = por %p87, %p88
      %p90 = scmp.le.s32.totalorder 1, %s9
      %p91 = scmp.lt.s32.totalorder %s9, 3
      %p92 = pnand %p90, %p91
      %p93 = pneg %p92
      // Predicated region
      $region9: #{_lambda_.1} parent=5 // pred_check
        _
      $region10: #{_lambda_.1} parent=5 // pred_check_branch
        %95 = sbr.rel (%p92) target = $region12
      $region11: #{_lambda_.1} parent=5 // pred_region
        %s96 = ssub.s32 %s9, 1
        // Predicated region
        $region13: #{_lambda_.1} parent=11 // pred_check
          %p97 = pneg %p30
        $region14: #{_lambda_.1} parent=11 // pred_check_branch
          %99 = sbr.rel (%p97) target = $region16
        $region15: #{_lambda_.1} parent=11 // pred_region
          %s101 = ssub.s32 8192, 8192
          %102 = vsyncadd [#allocation4], %s101
          %s103 = sshll.u32 [#allocation3], 4
          %s104 = int_to_ptr.vmem [resolvable:$true] %s103
          %109 = dma.hbm_to_vmem [thread:$0]  %s0, 8192, %s104, [#allocation4], 128, 128, 8
        $region16: #{_lambda_.1} parent=11 // pred_fallthru
          _
      $region12: #{_lambda_.1} parent=5 // pred_fallthru
        _
      %p110 = scmp.lt.s32.totalorder %s9, 2
      // Predicated region
      $region17: #{_lambda_.1} parent=5 // pred_check
        %p111 = pneg %p110
      $region18: #{_lambda_.1} parent=5 // pred_check_branch
        %113 = sbr.rel (%p111) target = $region20
      $region19: #{_lambda_.1} parent=5 // pred_region
        // Predicated region
        $region21: #{_lambda_.1} parent=19 // pred_check
          %p114 = pneg %p50
        $region22: #{_lambda_.1} parent=19 // pred_check_branch
          %116 = sbr.rel (%p114) target = $region24
        $region23: #{_lambda_.1} parent=19 // pred_region
          %s117 = sand.u32 %s40, 1
          %s118 = sand.u32 %s40, 1
          %s119 = smul.addr %s118, 32
          %s120 = scalar_lea.vmem [#allocation5], %s119
          %s121 = smul.addr %s9, 8
          %s122 = scalar_lea.vmem %s1, %s121
          // Predicated region
          $region25: #{_lambda_.1} parent=23 // pred_check
            _
          $region26: #{_lambda_.1} parent=23 // pred_check_branch
            %124 = sbr.rel (0) target = $region28
          $region27: #{_lambda_.1} parent=23 // pred_region
            // Predicated region
            $region29: #{_lambda_.1} parent=27 // pred_check
              _
            $region30: #{_lambda_.1} parent=27 // pred_check_branch
              %126 = sbr.rel (0) target = $region32
            $region31: #{_lambda_.1} parent=27 // pred_region
              // Predicated region
              $region44: #{_lambda_.1} parent=31 // pred_check
                _
              $region45: #{_lambda_.1} parent=31 // pred_check_branch
                %148 = sbr.rel (0) target = $region47
              $region46: #{_lambda_.1} parent=31 // pred_region
                loop: start=0, step=1, limit=1
                $region48: #{_lambda_.1} parent=46 // loop_pre_header
                  _
                $region49: #{_lambda_.1} parent=46 // loop_header
                  %s150 = sphi 0, %s154
                  %p151 = scmp.ge.s32.totalorder %s150, 1
                  %s155 = sphi %s122, %s122
                  %s156 = sphi %s120, %s120
                $region50: #{_lambda_.1} parent=46 // loop_header_branch
                  %153 = sbr.rel (%p151) target = $region54
                $region51: #{_lambda_.1} parent=46 // loop_body
                  %v157 = vld [vmem:[%s155] sm:$0xff]
                  %158 = vst [vmem:[%s156] sm:$0xff] %v157
                  %v159 = vld [vmem:[%s155 + $0x10] sm:$0xff]
                  %160 = vst [vmem:[%s156 + $0x8] sm:$0xff] %v159
                  %v161 = vld [vmem:[%s155 + $0x20] sm:$0xff]
                  %162 = vst [vmem:[%s156 + $0x10] sm:$0xff] %v161
                  %v163 = vld [vmem:[%s155 + $0x30] sm:$0xff]
                  %164 = vst [vmem:[%s156 + $0x18] sm:$0xff] %v163
                $region52: #{_lambda_.1} parent=46 // loop_footer
                  %s154 = sadd.s32 1, %s150
                $region53: #{_lambda_.1} parent=46 // loop_footer_branch
                  %149 = sbr.rel target = $region49
                $region54: #{_lambda_.1} parent=46 // loop_exit
                  _
              $region47: #{_lambda_.1} parent=31 // pred_fallthru
                _
              // Predicated region
              $region55: #{_lambda_.1} parent=31 // pred_check
                _
              $region56: #{_lambda_.1} parent=31 // pred_check_branch
                %166 = sbr.rel target = $region58
              $region57: #{_lambda_.1} parent=31 // pred_region
                _
              $region58: #{_lambda_.1} parent=31 // pred_fallthru
                _
            $region32: #{_lambda_.1} parent=27 // pred_fallthru
              _
            // Predicated region
            $region33: #{_lambda_.1} parent=27 // pred_check
              _
            $region34: #{_lambda_.1} parent=27 // pred_check_branch
              %128 = sbr.rel target = $region36
            $region35: #{_lambda_.1} parent=27 // pred_region
              %s130 = ssub.s32 256, 1
              loop: start=0, step=1, limit=1
              $region37: #{_lambda_.1} parent=35 // loop_pre_header
                _
              $region38: #{_lambda_.1} parent=35 // loop_header
                %s132 = sphi 0, %s136
                %p133 = scmp.ge.s32.totalorder %s132, 1
                %s137 = sphi %s122, %s122
                %s138 = sphi %s120, %s120
              $region39: #{_lambda_.1} parent=35 // loop_header_branch
                %135 = sbr.rel (%p133) target = $region43
              $region40: #{_lambda_.1} parent=35 // loop_body
                %v139 = vld [vmem:[%s137] sm:%s130]
                %140 = vst [vmem:[%s138] sm:%s130] %v139
                %v141 = vld [vmem:[%s137 + $0x10] sm:%s130]
                %142 = vst [vmem:[%s138 + $0x8] sm:%s130] %v141
                %v143 = vld [vmem:[%s137 + $0x20] sm:%s130]
                %144 = vst [vmem:[%s138 + $0x10] sm:%s130] %v143
                %v145 = vld [vmem:[%s137 + $0x30] sm:%s130]
                %146 = vst [vmem:[%s138 + $0x18] sm:%s130] %v145
              $region41: #{_lambda_.1} parent=35 // loop_footer
                %s136 = sadd.s32 1, %s132
              $region42: #{_lambda_.1} parent=35 // loop_footer_branch
                %131 = sbr.rel target = $region38
              $region43: #{_lambda_.1} parent=35 // loop_exit
                _
            $region36: #{_lambda_.1} parent=27 // pred_fallthru
              _
          $region28: #{_lambda_.1} parent=23 // pred_fallthru
            _
          %167 = vnop
        $region24: #{_lambda_.1} parent=19 // pred_fallthru
          _
      $region20: #{_lambda_.1} parent=5 // pred_fallthru
        _
      %p168 = scmp.le.s32.totalorder 1, %s9
      %p169 = scmp.lt.s32.totalorder %s9, 3
      %p170 = pnand %p168, %p169
      %p171 = pneg %p170
      // Predicated region
      $region59: #{_lambda_.1} parent=5 // pred_check
        _
      $region60: #{_lambda_.1} parent=5 // pred_check_branch
        %173 = sbr.rel (%p170) target = $region62
      $region61: #{_lambda_.1} parent=5 // pred_region
        %s174 = ssub.s32 %s9, 1
        // Predicated region
        $region63: #{_lambda_.1} parent=61 // pred_check
          %p175 = pneg %p30
        $region64: #{_lambda_.1} parent=61 // pred_check_branch
          %177 = sbr.rel (%p175) target = $region66
        $region65: #{_lambda_.1} parent=61 // pred_region
          %178 = dma.done [#allocation4], 8192
        $region66: #{_lambda_.1} parent=61 // pred_fallthru
          _
        %s179 = sand.u32 %s43, 1
        %s180 = sand.u32 %s43, 1
        %s181 = smul.addr %s180, 32
        %s182 = scalar_lea.vmem [#allocation5], %s181
        // Predicated region
        $region67: #{_lambda_.1} parent=61 // pred_check
          %p183 = pneg %p56
        $region68: #{_lambda_.1} parent=61 // pred_check_branch
          %185 = sbr.rel (%p183) target = $region70
        $region69: #{_lambda_.1} parent=61 // pred_region
          _
        $region70: #{_lambda_.1} parent=61 // pred_fallthru
          _
        %p186 = pneg %p30
        %p187 = pneg %p27
        %s188 = sand.u32 %s43, 1
        %s189 = sand.u32 %s43, 1
        %s190 = smul.addr %s189, 32
        %s191 = scalar_lea.vmem [#allocation5], %s190
        %p192 = pneg %p56
        %p193 = pneg %p53
        %p194 = pneg %p82
        %p195 = pneg %p79
        %s196 = sand.u32 %s69, 1
        %s197 = sand.u32 %s69, 1
        %s198 = smul.addr %s197, 64
        %s199 = scalar_lea.vmem [#allocation6], %s198
        %v200 = vlaneseq
        %v201 = vshrl.u32 %v200, 7
        %v202 = vadd.s32 %v201, 8
        %v203 = vadd.s32 %v201, 16
        %v204 = vadd.s32 %v201, 24
        %vm205 = vcmp.eq.s32.totalorder %v201, 0
        %vm206 = vcmp.eq.s32.totalorder %v202, 0
        %vm207 = vcmp.eq.s32.totalorder %v203, 0
        %vm208 = vcmp.eq.s32.totalorder %v204, 0
        %v209 = vsel %vm205, 1.0, 0.0
        %v210 = vsel %vm206, 1.0, 0.0
        %v211 = vsel %vm207, 1.0, 0.0
        %v212 = vsel %vm208, 1.0, 0.0
        %213 = vst [vmem:[#allocation2 + $0x60] sm:$0xff] %v209
        %214 = vst [vmem:[#allocation2 + $0x68] sm:$0xff] %v210
        %215 = vst [vmem:[#allocation2 + $0x70] sm:$0xff] %v211
        %216 = vst [vmem:[#allocation2 + $0x78] sm:$0xff] %v212
        %v217 = vld [vmem:[%s182] sm:$0xff]
        %v218 = vld [vmem:[%s182 + $0x8] sm:$0xff]
        %v219 = vld [vmem:[%s182 + $0x10] sm:$0xff]
        %v220 = vld [vmem:[%s182 + $0x18] sm:$0xff]
        %221 = vst [vmem:[#allocation2] sm:$0xff] %v217
        %222 = vst [vmem:[#allocation2 + $0x8] sm:$0xff] %v218
        %223 = vst [vmem:[#allocation2 + $0x10] sm:$0xff] %v219
        %224 = vst [vmem:[#allocation2 + $0x18] sm:$0xff] %v220
        %v225 = vmul.f32 %v217, %v217
        %v226 = vmul.f32 %v218, %v218
        %v227 = vmul.f32 %v219, %v219
        %v228 = vmul.f32 %v220, %v220
        %v229 = vadd.f32 %v225, 0.0
        %v230 = vadd.f32 %v226, 0.0
        %v231 = vadd.f32 %v227, 0.0
        %v232 = vadd.f32 %v228, 0.0
        %233 = vst [vmem:[#allocation2 + $0x20] sm:$0xff] %v229
        %234 = vst [vmem:[#allocation2 + $0x28] sm:$0xff] %v230
        %235 = vst [vmem:[#allocation2 + $0x30] sm:$0xff] %v231
        %236 = vst [vmem:[#allocation2 + $0x38] sm:$0xff] %v232
        %237 = vst [vmem:[#allocation2 + $0x40] sm:$0xff] 0.0
        %238 = vst [vmem:[#allocation2 + $0x48] sm:$0xff] 0.0
        %239 = vst [vmem:[#allocation2 + $0x50] sm:$0xff] 0.0
        %240 = vst [vmem:[#allocation2 + $0x58] sm:$0xff] 0.0
        %v241 = vld [vmem:[#allocation2] sm:$0xff]
        %v242 = vld [vmem:[#allocation2 + $0x8] sm:$0xff]
        %v243 = vld [vmem:[#allocation2 + $0x10] sm:$0xff]
        %v244 = vld [vmem:[#allocation2 + $0x18] sm:$0xff]
        %v245 = vld [vmem:[#allocation2 + $0x20] sm:$0xff]
        %v246 = vld [vmem:[#allocation2 + $0x28] sm:$0xff]
        %v247 = vld [vmem:[#allocation2 + $0x30] sm:$0xff]
        %v248 = vld [vmem:[#allocation2 + $0x38] sm:$0xff]
        %v249 = vld [vmem:[#allocation2 + $0x40] sm:$0xff]
        %v250 = vld [vmem:[#allocation2 + $0x48] sm:$0xff]
        %v251 = vld [vmem:[#allocation2 + $0x50] sm:$0xff]
        %v252 = vld [vmem:[#allocation2 + $0x58] sm:$0xff]
        %v253 = vld [vmem:[#allocation2 + $0x60] sm:$0xff]
        %v254 = vld [vmem:[#allocation2 + $0x68] sm:$0xff]
        %v255 = vld [vmem:[#allocation2 + $0x70] sm:$0xff]
        %v256 = vld [vmem:[#allocation2 + $0x78] sm:$0xff]
        %v257 = vld [vmem:[#allocation3] sm:$0xff]
        %v258 = vld [vmem:[#allocation3 + $0x8] sm:$0xff]
        %v259 = vld [vmem:[#allocation3 + $0x10] sm:$0xff]
        %v260 = vld [vmem:[#allocation3 + $0x18] sm:$0xff]
        %v261 = vld [vmem:[#allocation3 + $0x20] sm:$0xff]
        %v262 = vld [vmem:[#allocation3 + $0x28] sm:$0xff]
        %v263 = vld [vmem:[#allocation3 + $0x30] sm:$0xff]
        %v264 = vld [vmem:[#allocation3 + $0x38] sm:$0xff]
        %265 = vmatprep.subr.mxu0 0.0
        %266 = vmatpush1.msra.mxu0 %v256
        %267 = vmatprep.subr.mxu0 0.0
        %268 = vmatpush1.msra.mxu0 %v255
        %269 = vmatprep.subr.mxu0 0.0
        %270 = vmatpush1.msra.mxu0 %v254
        %271 = vmatprep.subr.mxu0 0.0
        %272 = vmatpush1.msra.mxu0 %v253
        %273 = vmatprep.subr.mxu0 0.0
        %274 = vmatpush1.msra.mxu0 %v252
        %275 = vmatprep.subr.mxu0 0.0
        %276 = vmatpush1.msra.mxu0 %v251
        %277 = vmatprep.subr.mxu0 0.0
        %278 = vmatpush1.msra.mxu0 %v250
        %279 = vmatprep.subr.mxu0 0.0
        %280 = vmatpush1.msra.mxu0 %v249
        %281 = vmatprep.subr.mxu0 0.0
        %282 = vmatpush1.msra.mxu0 %v248
        %283 = vmatprep.subr.mxu0 0.0
        %284 = vmatpush1.msra.mxu0 %v247
        %285 = vmatprep.subr.mxu0 0.0
        %286 = vmatpush1.msra.mxu0 %v246
        %287 = vmatprep.subr.mxu0 0.0
        %288 = vmatpush1.msra.mxu0 %v245
        %289 = vmatprep.subr.mxu0 0.0
        %290 = vmatpush1.msra.mxu0 %v244
        %291 = vmatprep.subr.mxu0 0.0
        %292 = vmatpush1.msra.mxu0 %v243
        %293 = vmatprep.subr.mxu0 0.0
        %294 = vmatpush1.msra.mxu0 %v242
        %295 = vmatprep.subr.mxu0 0.0
        %296 = vmatpush1.msra.mxu0 %v241
        %297 = vmatprep.subr.mxu0 0.0
        %298 = vmatpush2.msra.mxu0 0.0
        %299 = vmatprep.subr.mxu0 0.0
        %300 = vmatpush2.msra.mxu0 0.0
        %301 = vmatprep.subr.mxu0 0.0
        %302 = vmatpush2.msra.mxu0 0.0
        %303 = vmatprep.subr.mxu0 0.0
        %304 = vmatpush2.msra.mxu0 0.0
        %305 = vmatprep.subr.mxu0 0.0
        %306 = vmatpush2.msra.mxu0 0.0
        %307 = vmatprep.subr.mxu0 0.0
        %308 = vmatpush2.msra.mxu0 0.0
        %309 = vmatprep.subr.mxu0 0.0
        %310 = vmatpush2.msra.mxu0 0.0
        %311 = vmatprep.subr.mxu0 0.0
        %312 = vmatpush2.msra.mxu0 0.0
        %313 = vmatprep.subr.mxu0 0.0
        %314 = vmatpush2.msra.mxu0 0.0
        %315 = vmatprep.subr.mxu0 0.0
        %316 = vmatpush2.msra.mxu0 0.0
        %317 = vmatprep.subr.mxu0 0.0
        %318 = vmatpush2.msra.mxu0 0.0
        %319 = vmatprep.subr.mxu0 0.0
        %320 = vmatpush2.msra.mxu0 0.0
        %321 = vmatprep.subr.mxu0 0.0
        %322 = vmatpush2.msra.mxu0 0.0
        %323 = vmatprep.subr.mxu0 0.0
        %324 = vmatpush2.msra.mxu0 0.0
        %325 = vmatprep.subr.mxu0 0.0
        %326 = vmatpush2.msra.mxu0 0.0
        %327 = vmatprep.subr.mxu0 0.0
        %328 = vmatpush2.msra.mxu0 0.0
        %329 = vmatprep.mubr.f32.mxu0 0.0
        %330 = vmatmul.mubr.f32.gmra.mxu0 %v257
        %v331 = vpop.f32.mrf.mxu0
        %v332 = vadd.f32 0.0, %v331
        %v333 = vpop.f32.mrf.mxu0
        %334 = vmatprep.mubr.f32.mxu0 0.0
        %335 = vmatmul.mubr.f32.gmra.mxu0 %v258
        %v336 = vpop.f32.mrf.mxu0
        %v337 = vadd.f32 0.0, %v336
        %v338 = vpop.f32.mrf.mxu0
        %339 = vmatprep.mubr.f32.mxu0 0.0
        %340 = vmatmul.mubr.f32.gmra.mxu0 %v259
        %v341 = vpop.f32.mrf.mxu0
        %v342 = vadd.f32 0.0, %v341
        %v343 = vpop.f32.mrf.mxu0
        %344 = vmatprep.mubr.f32.mxu0 0.0
        %345 = vmatmul.mubr.f32.gmra.mxu0 %v260
        %v346 = vpop.f32.mrf.mxu0
        %v347 = vadd.f32 0.0, %v346
        %v348 = vpop.f32.mrf.mxu0
        %349 = vmatprep.mubr.f32.mxu0 0.0
        %350 = vmatmul.mubr.f32.gmra.mxu0 %v261
        %v351 = vpop.f32.mrf.mxu0
        %v352 = vadd.f32 0.0, %v351
        %v353 = vpop.f32.mrf.mxu0
        %354 = vmatprep.mubr.f32.mxu0 0.0
        %355 = vmatmul.mubr.f32.gmra.mxu0 %v262
        %v356 = vpop.f32.mrf.mxu0
        %v357 = vadd.f32 0.0, %v356
        %v358 = vpop.f32.mrf.mxu0
        %359 = vmatprep.mubr.f32.mxu0 0.0
        %360 = vmatmul.mubr.f32.gmra.mxu0 %v263
        %v361 = vpop.f32.mrf.mxu0
        %v362 = vadd.f32 0.0, %v361
        %v363 = vpop.f32.mrf.mxu0
        %364 = vmatprep.mubr.f32.mxu0 0.0
        %365 = vmatmul.mubr.f32.gmra.mxu0 %v264
        %v366 = vpop.f32.mrf.mxu0
        %v367 = vadd.f32 0.0, %v366
        %v368 = vpop.f32.mrf.mxu0
        %369 = vdwg.mxu0
        %v370 = vmul.f32 %v332, 1.442695
        %v371 = vpow.pop %v370
        %v372 = vmul.f32 %v337, 1.442695
        %v373 = vpow.pop %v372
        %v374 = vmul.f32 %v342, 1.442695
        %v375 = vpow.pop %v374
        %v376 = vmul.f32 %v347, 1.442695
        %v377 = vpow.pop %v376
        %vm378 = vcmp.gt.f32.partialorder %v332, 0.0
        %vm379 = vcmp.gt.f32.partialorder %v337, 0.0
        %vm380 = vcmp.gt.f32.partialorder %v342, 0.0
        %vm381 = vcmp.gt.f32.partialorder %v347, 0.0
        %v382 = vsub.f32 %v371, 1.0
        %v383 = vsub.f32 %v373, 1.0
        %v384 = vsub.f32 %v375, 1.0
        %v385 = vsub.f32 %v377, 1.0
        %v386 = vmul.f32 %v382, 1.6732632
        %v387 = vmul.f32 %v383, 1.6732632
        %v388 = vmul.f32 %v384, 1.6732632
        %v389 = vmul.f32 %v385, 1.6732632
        %v390 = vsel %vm378, %v332, %v386
        %v391 = vsel %vm379, %v337, %v387
        %v392 = vsel %vm380, %v342, %v388
        %v393 = vsel %vm381, %v347, %v389
        %v394 = vmul.f32 %v390, 1.050701
        %v395 = vmul.f32 %v391, 1.050701
        %v396 = vmul.f32 %v392, 1.050701
        %v397 = vmul.f32 %v393, 1.050701
        %v398 = vmul.f32 %v371, 1.6732632
        %v399 = vmul.f32 %v373, 1.6732632
        %v400 = vmul.f32 %v375, 1.6732632
        %v401 = vmul.f32 %v377, 1.6732632
        %v402 = vsel %vm378, 1.0, %v398
        %v403 = vsel %vm379, 1.0, %v399
        %v404 = vsel %vm380, 1.0, %v400
        %v405 = vsel %vm381, 1.0, %v401
        %v406 = vmul.f32 %v402, 1.050701
        %v407 = vmul.f32 %v403, 1.050701
        %v408 = vmul.f32 %v404, 1.050701
        %v409 = vmul.f32 %v405, 1.050701
        %v410 = vmul.f32 %v352, %v406
        %v411 = vmul.f32 %v357, %v407
        %v412 = vmul.f32 %v362, %v408
        %v413 = vmul.f32 %v367, %v409
        %v414 = vmul.f32 %v410, %v406
        %v415 = vmul.f32 %v411, %v407
        %v416 = vmul.f32 %v412, %v408
        %v417 = vmul.f32 %v413, %v409
        %418 = vst [vmem:[#allocation2] sm:$0xff] %v394
        %419 = vst [vmem:[#allocation2 + $0x8] sm:$0xff] %v395
        %420 = vst [vmem:[#allocation2 + $0x10] sm:$0xff] %v396
        %421 = vst [vmem:[#allocation2 + $0x18] sm:$0xff] %v397
        %v422 = vmul.f32 %v394, %v394
        %v423 = vmul.f32 %v395, %v395
        %v424 = vmul.f32 %v396, %v396
        %v425 = vmul.f32 %v397, %v397
        %v426 = vadd.f32 %v422, %v414
        %v427 = vadd.f32 %v423, %v415
        %v428 = vadd.f32 %v424, %v416
        %v429 = vadd.f32 %v425, %v417
        %430 = vst [vmem:[#allocation2 + $0x20] sm:$0xff] %v426
        %431 = vst [vmem:[#allocation2 + $0x28] sm:$0xff] %v427
        %432 = vst [vmem:[#allocation2 + $0x30] sm:$0xff] %v428
        %433 = vst [vmem:[#allocation2 + $0x38] sm:$0xff] %v429
        %434 = vst [vmem:[#allocation2 + $0x40] sm:$0xff] %v414
        %435 = vst [vmem:[#allocation2 + $0x48] sm:$0xff] %v415
        %436 = vst [vmem:[#allocation2 + $0x50] sm:$0xff] %v416
        %437 = vst [vmem:[#allocation2 + $0x58] sm:$0xff] %v417
        %v438 = vld [vmem:[#allocation2] sm:$0xff]
        %v439 = vld [vmem:[#allocation2 + $0x8] sm:$0xff]
        %v440 = vld [vmem:[#allocation2 + $0x10] sm:$0xff]
        %v441 = vld [vmem:[#allocation2 + $0x18] sm:$0xff]
        %v442 = vld [vmem:[#allocation2 + $0x20] sm:$0xff]
        %v443 = vld [vmem:[#allocation2 + $0x28] sm:$0xff]
        %v444 = vld [vmem:[#allocation2 + $0x30] sm:$0xff]
        %v445 = vld [vmem:[#allocation2 + $0x38] sm:$0xff]
        %v446 = vld [vmem:[#allocation2 + $0x40] sm:$0xff]
        %v447 = vld [vmem:[#allocation2 + $0x48] sm:$0xff]
        %v448 = vld [vmem:[#allocation2 + $0x50] sm:$0xff]
        %v449 = vld [vmem:[#allocation2 + $0x58] sm:$0xff]
        %v450 = vld [vmem:[#allocation2 + $0x60] sm:$0xff]
        %v451 = vld [vmem:[#allocation2 + $0x68] sm:$0xff]
        %v452 = vld [vmem:[#allocation2 + $0x70] sm:$0xff]
        %v453 = vld [vmem:[#allocation2 + $0x78] sm:$0xff]
        %s454 = scalar_lea.vmem [#allocation3], 64
        %v455 = vld [vmem:[%s454] sm:$0xff]
        %v456 = vld [vmem:[%s454 + $0x8] sm:$0xff]
        %v457 = vld [vmem:[%s454 + $0x10] sm:$0xff]
        %v458 = vld [vmem:[%s454 + $0x18] sm:$0xff]
        %v459 = vld [vmem:[%s454 + $0x20] sm:$0xff]
        %v460 = vld [vmem:[%s454 + $0x28] sm:$0xff]
        %v461 = vld [vmem:[%s454 + $0x30] sm:$0xff]
        %v462 = vld [vmem:[%s454 + $0x38] sm:$0xff]
        %463 = vmatprep.subr.mxu0 0.0
        %464 = vmatpush1.msra.mxu0 %v453
        %465 = vmatprep.subr.mxu0 0.0
        %466 = vmatpush1.msra.mxu0 %v452
        %467 = vmatprep.subr.mxu0 0.0
        %468 = vmatpush1.msra.mxu0 %v451
        %469 = vmatprep.subr.mxu0 0.0
        %470 = vmatpush1.msra.mxu0 %v450
        %471 = vmatprep.subr.mxu0 0.0
        %472 = vmatpush1.msra.mxu0 %v449
        %473 = vmatprep.subr.mxu0 0.0
        %474 = vmatpush1.msra.mxu0 %v448
        %475 = vmatprep.subr.mxu0 0.0
        %476 = vmatpush1.msra.mxu0 %v447
        %477 = vmatprep.subr.mxu0 0.0
        %478 = vmatpush1.msra.mxu0 %v446
        %479 = vmatprep.subr.mxu0 0.0
        %480 = vmatpush1.msra.mxu0 %v445
        %481 = vmatprep.subr.mxu0 0.0
        %482 = vmatpush1.msra.mxu0 %v444
        %483 = vmatprep.subr.mxu0 0.0
        %484 = vmatpush1.msra.mxu0 %v443
        %485 = vmatprep.subr.mxu0 0.0
        %486 = vmatpush1.msra.mxu0 %v442
        %487 = vmatprep.subr.mxu0 0.0
        %488 = vmatpush1.msra.mxu0 %v441
        %489 = vmatprep.subr.mxu0 0.0
        %490 = vmatpush1.msra.mxu0 %v440
        %491 = vmatprep.subr.mxu0 0.0
        %492 = vmatpush1.msra.mxu0 %v439
        %493 = vmatprep.subr.mxu0 0.0
        %494 = vmatpush1.msra.mxu0 %v438
        %495 = vmatprep.subr.mxu0 0.0
        %496 = vmatpush2.msra.mxu0 0.0
        %497 = vmatprep.subr.mxu0 0.0
        %498 = vmatpush2.msra.mxu0 0.0
        %499 = vmatprep.subr.mxu0 0.0
        %500 = vmatpush2.msra.mxu0 0.0
        %501 = vmatprep.subr.mxu0 0.0
        %502 = vmatpush2.msra.mxu0 0.0
        %503 = vmatprep.subr.mxu0 0.0
        %504 = vmatpush2.msra.mxu0 0.0
        %505 = vmatprep.subr.mxu0 0.0
        %506 = vmatpush2.msra.mxu0 0.0
        %507 = vmatprep.subr.mxu0 0.0
        %508 = vmatpush2.msra.mxu0 0.0
        %509 = vmatprep.subr.mxu0 0.0
        %510 = vmatpush2.msra.mxu0 0.0
        %511 = vmatprep.subr.mxu0 0.0
        %512 = vmatpush2.msra.mxu0 0.0
        %513 = vmatprep.subr.mxu0 0.0
        %514 = vmatpush2.msra.mxu0 0.0
        %515 = vmatprep.subr.mxu0 0.0
        %516 = vmatpush2.msra.mxu0 0.0
        %517 = vmatprep.subr.mxu0 0.0
        %518 = vmatpush2.msra.mxu0 0.0
        %519 = vmatprep.subr.mxu0 0.0
        %520 = vmatpush2.msra.mxu0 0.0
        %521 = vmatprep.subr.mxu0 0.0
        %522 = vmatpush2.msra.mxu0 0.0
        %523 = vmatprep.subr.mxu0 0.0
        %524 = vmatpush2.msra.mxu0 0.0
        %525 = vmatprep.subr.mxu0 0.0
        %526 = vmatpush2.msra.mxu0 0.0
        %527 = vmatprep.mubr.f32.mxu0 0.0
        %528 = vmatmul.mubr.f32.gmra.mxu0 %v455
        %v529 = vpop.f32.mrf.mxu0
        %v530 = vadd.f32 0.0, %v529
        %v531 = vpop.f32.mrf.mxu0
        %532 = vmatprep.mubr.f32.mxu0 0.0
        %533 = vmatmul.mubr.f32.gmra.mxu0 %v456
        %v534 = vpop.f32.mrf.mxu0
        %v535 = vadd.f32 0.0, %v534
        %v536 = vpop.f32.mrf.mxu0
        %537 = vmatprep.mubr.f32.mxu0 0.0
        %538 = vmatmul.mubr.f32.gmra.mxu0 %v457
        %v539 = vpop.f32.mrf.mxu0
        %v540 = vadd.f32 0.0, %v539
        %v541 = vpop.f32.mrf.mxu0
        %542 = vmatprep.mubr.f32.mxu0 0.0
        %543 = vmatmul.mubr.f32.gmra.mxu0 %v458
        %v544 = vpop.f32.mrf.mxu0
        %v545 = vadd.f32 0.0, %v544
        %v546 = vpop.f32.mrf.mxu0
        %547 = vmatprep.mubr.f32.mxu0 0.0
        %548 = vmatmul.mubr.f32.gmra.mxu0 %v459
        %v549 = vpop.f32.mrf.mxu0
        %v550 = vadd.f32 0.0, %v549
        %v551 = vpop.f32.mrf.mxu0
        %552 = vmatprep.mubr.f32.mxu0 0.0
        %553 = vmatmul.mubr.f32.gmra.mxu0 %v460
        %v554 = vpop.f32.mrf.mxu0
        %v555 = vadd.f32 0.0, %v554
        %v556 = vpop.f32.mrf.mxu0
        %557 = vmatprep.mubr.f32.mxu0 0.0
        %558 = vmatmul.mubr.f32.gmra.mxu0 %v461
        %v559 = vpop.f32.mrf.mxu0
        %v560 = vadd.f32 0.0, %v559
        %v561 = vpop.f32.mrf.mxu0
        %562 = vmatprep.mubr.f32.mxu0 0.0
        %563 = vmatmul.mubr.f32.gmra.mxu0 %v462
        %v564 = vpop.f32.mrf.mxu0
        %v565 = vadd.f32 0.0, %v564
        %v566 = vpop.f32.mrf.mxu0
        %567 = vdwg.mxu0
        %v568 = vmul.f32 %v530, 1.442695
        %v569 = vpow.pop %v568
        %v570 = vmul.f32 %v535, 1.442695
        %v571 = vpow.pop %v570
        %v572 = vmul.f32 %v540, 1.442695
        %v573 = vpow.pop %v572
        %v574 = vmul.f32 %v545, 1.442695
        %v575 = vpow.pop %v574
        %vm576 = vcmp.gt.f32.partialorder %v530, 0.0
        %vm577 = vcmp.gt.f32.partialorder %v535, 0.0
        %vm578 = vcmp.gt.f32.partialorder %v540, 0.0
        %vm579 = vcmp.gt.f32.partialorder %v545, 0.0
        %v580 = vsub.f32 %v569, 1.0
        %v581 = vsub.f32 %v571, 1.0
        %v582 = vsub.f32 %v573, 1.0
        %v583 = vsub.f32 %v575, 1.0
        %v584 = vmul.f32 %v580, 1.6732632
        %v585 = vmul.f32 %v581, 1.6732632
        %v586 = vmul.f32 %v582, 1.6732632
        %v587 = vmul.f32 %v583, 1.6732632
        %v588 = vsel %vm576, %v530, %v584
        %v589 = vsel %vm577, %v535, %v585
        %v590 = vsel %vm578, %v540, %v586
        %v591 = vsel %vm579, %v545, %v587
        %v592 = vmul.f32 %v588, 1.050701
        %v593 = vmul.f32 %v589, 1.050701
        %v594 = vmul.f32 %v590, 1.050701
        %v595 = vmul.f32 %v591, 1.050701
        %v596 = vmul.f32 %v569, 1.6732632
        %v597 = vmul.f32 %v571, 1.6732632
        %v598 = vmul.f32 %v573, 1.6732632
        %v599 = vmul.f32 %v575, 1.6732632
        %v600 = vsel %vm576, 1.0, %v596
        %v601 = vsel %vm577, 1.0, %v597
        %v602 = vsel %vm578, 1.0, %v598
        %v603 = vsel %vm579, 1.0, %v599
        %v604 = vmul.f32 %v600, 1.050701
        %v605 = vmul.f32 %v601, 1.050701
        %v606 = vmul.f32 %v602, 1.050701
        %v607 = vmul.f32 %v603, 1.050701
        %v608 = vmul.f32 %v550, %v604
        %v609 = vmul.f32 %v555, %v605
        %v610 = vmul.f32 %v560, %v606
        %v611 = vmul.f32 %v565, %v607
        %v612 = vmul.f32 %v608, %v604
        %v613 = vmul.f32 %v609, %v605
        %v614 = vmul.f32 %v610, %v606
        %v615 = vmul.f32 %v611, %v607
        %616 = vst [vmem:[#allocation2] sm:$0xff] %v592
        %617 = vst [vmem:[#allocation2 + $0x8] sm:$0xff] %v593
        %618 = vst [vmem:[#allocation2 + $0x10] sm:$0xff] %v594
        %619 = vst [vmem:[#allocation2 + $0x18] sm:$0xff] %v595
        %v620 = vmul.f32 %v592, %v592
        %v621 = vmul.f32 %v593, %v593
        %v622 = vmul.f32 %v594, %v594
        %v623 = vmul.f32 %v595, %v595
        %v624 = vadd.f32 %v620, %v612
        %v625 = vadd.f32 %v621, %v613
        %v626 = vadd.f32 %v622, %v614
        %v627 = vadd.f32 %v623, %v615
        %628 = vst [vmem:[#allocation2 + $0x20] sm:$0xff] %v624
        %629 = vst [vmem:[#allocation2 + $0x28] sm:$0xff] %v625
        %630 = vst [vmem:[#allocation2 + $0x30] sm:$0xff] %v626
        %631 = vst [vmem:[#allocation2 + $0x38] sm:$0xff] %v627
        %632 = vst [vmem:[#allocation2 + $0x40] sm:$0xff] %v612
        %633 = vst [vmem:[#allocation2 + $0x48] sm:$0xff] %v613
        %634 = vst [vmem:[#allocation2 + $0x50] sm:$0xff] %v614
        %635 = vst [vmem:[#allocation2 + $0x58] sm:$0xff] %v615
        %v636 = vld [vmem:[#allocation2] sm:$0xff]
        %v637 = vld [vmem:[#allocation2 + $0x8] sm:$0xff]
        %v638 = vld [vmem:[#allocation2 + $0x10] sm:$0xff]
        %v639 = vld [vmem:[#allocation2 + $0x18] sm:$0xff]
        %v640 = vld [vmem:[#allocation2 + $0x20] sm:$0xff]
        %v641 = vld [vmem:[#allocation2 + $0x28] sm:$0xff]
        %v642 = vld [vmem:[#allocation2 + $0x30] sm:$0xff]
        %v643 = vld [vmem:[#allocation2 + $0x38] sm:$0xff]
        %v644 = vld [vmem:[#allocation2 + $0x40] sm:$0xff]
        %v645 = vld [vmem:[#allocation2 + $0x48] sm:$0xff]
        %v646 = vld [vmem:[#allocation2 + $0x50] sm:$0xff]
        %v647 = vld [vmem:[#allocation2 + $0x58] sm:$0xff]
        %v648 = vld [vmem:[#allocation2 + $0x60] sm:$0xff]
        %v649 = vld [vmem:[#allocation2 + $0x68] sm:$0xff]
        %v650 = vld [vmem:[#allocation2 + $0x70] sm:$0xff]
        %v651 = vld [vmem:[#allocation2 + $0x78] sm:$0xff]
        %s652 = scalar_lea.vmem [#allocation3], 128
        %v653 = vld [vmem:[%s652] sm:$0xff]
        %v654 = vld [vmem:[%s652 + $0x8] sm:$0xff]
        %v655 = vld [vmem:[%s652 + $0x10] sm:$0xff]
        %v656 = vld [vmem:[%s652 + $0x18] sm:$0xff]
        %v657 = vld [vmem:[%s652 + $0x20] sm:$0xff]
        %v658 = vld [vmem:[%s652 + $0x28] sm:$0xff]
        %v659 = vld [vmem:[%s652 + $0x30] sm:$0xff]
        %v660 = vld [vmem:[%s652 + $0x38] sm:$0xff]
        %661 = vmatprep.subr.mxu0 0.0
        %662 = vmatpush1.msra.mxu0 %v651
        %663 = vmatprep.subr.mxu0 0.0
        %664 = vmatpush1.msra.mxu0 %v650
        %665 = vmatprep.subr.mxu0 0.0
        %666 = vmatpush1.msra.mxu0 %v649
        %667 = vmatprep.subr.mxu0 0.0
        %668 = vmatpush1.msra.mxu0 %v648
        %669 = vmatprep.subr.mxu0 0.0
        %670 = vmatpush1.msra.mxu0 %v647
        %671 = vmatprep.subr.mxu0 0.0
        %672 = vmatpush1.msra.mxu0 %v646
        %673 = vmatprep.subr.mxu0 0.0
        %674 = vmatpush1.msra.mxu0 %v645
        %675 = vmatprep.subr.mxu0 0.0
        %676 = vmatpush1.msra.mxu0 %v644
        %677 = vmatprep.subr.mxu0 0.0
        %678 = vmatpush1.msra.mxu0 %v643
        %679 = vmatprep.subr.mxu0 0.0
        %680 = vmatpush1.msra.mxu0 %v642
        %681 = vmatprep.subr.mxu0 0.0
        %682 = vmatpush1.msra.mxu0 %v641
        %683 = vmatprep.subr.mxu0 0.0
        %684 = vmatpush1.msra.mxu0 %v640
        %685 = vmatprep.subr.mxu0 0.0
        %686 = vmatpush1.msra.mxu0 %v639
        %687 = vmatprep.subr.mxu0 0.0
        %688 = vmatpush1.msra.mxu0 %v638
        %689 = vmatprep.subr.mxu0 0.0
        %690 = vmatpush1.msra.mxu0 %v637
        %691 = vmatprep.subr.mxu0 0.0
        %692 = vmatpush1.msra.mxu0 %v636
        %693 = vmatprep.subr.mxu0 0.0
        %694 = vmatpush2.msra.mxu0 0.0
        %695 = vmatprep.subr.mxu0 0.0
        %696 = vmatpush2.msra.mxu0 0.0
        %697 = vmatprep.subr.mxu0 0.0
        %698 = vmatpush2.msra.mxu0 0.0
        %699 = vmatprep.subr.mxu0 0.0
        %700 = vmatpush2.msra.mxu0 0.0
        %701 = vmatprep.subr.mxu0 0.0
        %702 = vmatpush2.msra.mxu0 0.0
        %703 = vmatprep.subr.mxu0 0.0
        %704 = vmatpush2.msra.mxu0 0.0
        %705 = vmatprep.subr.mxu0 0.0
        %706 = vmatpush2.msra.mxu0 0.0
        %707 = vmatprep.subr.mxu0 0.0
        %708 = vmatpush2.msra.mxu0 0.0
        %709 = vmatprep.subr.mxu0 0.0
        %710 = vmatpush2.msra.mxu0 0.0
        %711 = vmatprep.subr.mxu0 0.0
        %712 = vmatpush2.msra.mxu0 0.0
        %713 = vmatprep.subr.mxu0 0.0
        %714 = vmatpush2.msra.mxu0 0.0
        %715 = vmatprep.subr.mxu0 0.0
        %716 = vmatpush2.msra.mxu0 0.0
        %717 = vmatprep.subr.mxu0 0.0
        %718 = vmatpush2.msra.mxu0 0.0
        %719 = vmatprep.subr.mxu0 0.0
        %720 = vmatpush2.msra.mxu0 0.0
        %721 = vmatprep.subr.mxu0 0.0
        %722 = vmatpush2.msra.mxu0 0.0
        %723 = vmatprep.subr.mxu0 0.0
        %724 = vmatpush2.msra.mxu0 0.0
        %725 = vmatprep.mubr.f32.mxu0 0.0
        %726 = vmatmul.mubr.f32.gmra.mxu0 %v653
        %v727 = vpop.f32.mrf.mxu0
        %v728 = vadd.f32 0.0, %v727
        %v729 = vpop.f32.mrf.mxu0
        %730 = vmatprep.mubr.f32.mxu0 0.0
        %731 = vmatmul.mubr.f32.gmra.mxu0 %v654
        %v732 = vpop.f32.mrf.mxu0
        %v733 = vadd.f32 0.0, %v732
        %v734 = vpop.f32.mrf.mxu0
        %735 = vmatprep.mubr.f32.mxu0 0.0
        %736 = vmatmul.mubr.f32.gmra.mxu0 %v655
        %v737 = vpop.f32.mrf.mxu0
        %v738 = vadd.f32 0.0, %v737
        %v739 = vpop.f32.mrf.mxu0
        %740 = vmatprep.mubr.f32.mxu0 0.0
        %741 = vmatmul.mubr.f32.gmra.mxu0 %v656
        %v742 = vpop.f32.mrf.mxu0
        %v743 = vadd.f32 0.0, %v742
        %v744 = vpop.f32.mrf.mxu0
        %745 = vmatprep.mubr.f32.mxu0 0.0
        %746 = vmatmul.mubr.f32.gmra.mxu0 %v657
        %v747 = vpop.f32.mrf.mxu0
        %v748 = vadd.f32 0.0, %v747
        %v749 = vpop.f32.mrf.mxu0
        %750 = vmatprep.mubr.f32.mxu0 0.0
        %751 = vmatmul.mubr.f32.gmra.mxu0 %v658
        %v752 = vpop.f32.mrf.mxu0
        %v753 = vadd.f32 0.0, %v752
        %v754 = vpop.f32.mrf.mxu0
        %755 = vmatprep.mubr.f32.mxu0 0.0
        %756 = vmatmul.mubr.f32.gmra.mxu0 %v659
        %v757 = vpop.f32.mrf.mxu0
        %v758 = vadd.f32 0.0, %v757
        %v759 = vpop.f32.mrf.mxu0
        %760 = vmatprep.mubr.f32.mxu0 0.0
        %761 = vmatmul.mubr.f32.gmra.mxu0 %v660
        %v762 = vpop.f32.mrf.mxu0
        %v763 = vadd.f32 0.0, %v762
        %v764 = vpop.f32.mrf.mxu0
        %765 = vdwg.mxu0
        %v766 = vmul.f32 %v728, 1.442695
        %v767 = vpow.pop %v766
        %v768 = vmul.f32 %v733, 1.442695
        %v769 = vpow.pop %v768
        %v770 = vmul.f32 %v738, 1.442695
        %v771 = vpow.pop %v770
        %v772 = vmul.f32 %v743, 1.442695
        %v773 = vpow.pop %v772
        %vm774 = vcmp.gt.f32.partialorder %v728, 0.0
        %vm775 = vcmp.gt.f32.partialorder %v733, 0.0
        %vm776 = vcmp.gt.f32.partialorder %v738, 0.0
        %vm777 = vcmp.gt.f32.partialorder %v743, 0.0
        %v778 = vsub.f32 %v767, 1.0
        %v779 = vsub.f32 %v769, 1.0
        %v780 = vsub.f32 %v771, 1.0
        %v781 = vsub.f32 %v773, 1.0
        %v782 = vmul.f32 %v778, 1.6732632
        %v783 = vmul.f32 %v779, 1.6732632
        %v784 = vmul.f32 %v780, 1.6732632
        %v785 = vmul.f32 %v781, 1.6732632
        %v786 = vsel %vm774, %v728, %v782
        %v787 = vsel %vm775, %v733, %v783
        %v788 = vsel %vm776, %v738, %v784
        %v789 = vsel %vm777, %v743, %v785
        %v790 = vmul.f32 %v786, 1.050701
        %v791 = vmul.f32 %v787, 1.050701
        %v792 = vmul.f32 %v788, 1.050701
        %v793 = vmul.f32 %v789, 1.050701
        %v794 = vmul.f32 %v767, 1.6732632
        %v795 = vmul.f32 %v769, 1.6732632
        %v796 = vmul.f32 %v771, 1.6732632
        %v797 = vmul.f32 %v773, 1.6732632
        %v798 = vsel %vm774, 1.0, %v794
        %v799 = vsel %vm775, 1.0, %v795
        %v800 = vsel %vm776, 1.0, %v796
        %v801 = vsel %vm777, 1.0, %v797
        %v802 = vmul.f32 %v798, 1.050701
        %v803 = vmul.f32 %v799, 1.050701
        %v804 = vmul.f32 %v800, 1.050701
        %v805 = vmul.f32 %v801, 1.050701
        %v806 = vmul.f32 %v748, %v802
        %v807 = vmul.f32 %v753, %v803
        %v808 = vmul.f32 %v758, %v804
        %v809 = vmul.f32 %v763, %v805
        %v810 = vmul.f32 %v806, %v802
        %v811 = vmul.f32 %v807, %v803
        %v812 = vmul.f32 %v808, %v804
        %v813 = vmul.f32 %v809, %v805
        %814 = vst [vmem:[#allocation2] sm:$0xff] %v790
        %815 = vst [vmem:[#allocation2 + $0x8] sm:$0xff] %v791
        %816 = vst [vmem:[#allocation2 + $0x10] sm:$0xff] %v792
        %817 = vst [vmem:[#allocation2 + $0x18] sm:$0xff] %v793
        %v818 = vmul.f32 %v790, %v790
        %v819 = vmul.f32 %v791, %v791
        %v820 = vmul.f32 %v792, %v792
        %v821 = vmul.f32 %v793, %v793
        %v822 = vadd.f32 %v818, %v810
        %v823 = vadd.f32 %v819, %v811
        %v824 = vadd.f32 %v820, %v812
        %v825 = vadd.f32 %v821, %v813
        %826 = vst [vmem:[#allocation2 + $0x20] sm:$0xff] %v822
        %827 = vst [vmem:[#allocation2 + $0x28] sm:$0xff] %v823
        %828 = vst [vmem:[#allocation2 + $0x30] sm:$0xff] %v824
        %829 = vst [vmem:[#allocation2 + $0x38] sm:$0xff] %v825
        %830 = vst [vmem:[#allocation2 + $0x40] sm:$0xff] %v810
        %831 = vst [vmem:[#allocation2 + $0x48] sm:$0xff] %v811
        %832 = vst [vmem:[#allocation2 + $0x50] sm:$0xff] %v812
        %833 = vst [vmem:[#allocation2 + $0x58] sm:$0xff] %v813
        %v834 = vld [vmem:[#allocation2] sm:$0xff]
        %v835 = vld [vmem:[#allocation2 + $0x8] sm:$0xff]
        %v836 = vld [vmem:[#allocation2 + $0x10] sm:$0xff]
        %v837 = vld [vmem:[#allocation2 + $0x18] sm:$0xff]
        %v838 = vld [vmem:[#allocation2 + $0x20] sm:$0xff]
        %v839 = vld [vmem:[#allocation2 + $0x28] sm:$0xff]
        %v840 = vld [vmem:[#allocation2 + $0x30] sm:$0xff]
        %v841 = vld [vmem:[#allocation2 + $0x38] sm:$0xff]
        %v842 = vld [vmem:[#allocation2 + $0x40] sm:$0xff]
        %v843 = vld [vmem:[#allocation2 + $0x48] sm:$0xff]
        %v844 = vld [vmem:[#allocation2 + $0x50] sm:$0xff]
        %v845 = vld [vmem:[#allocation2 + $0x58] sm:$0xff]
        %v846 = vld [vmem:[#allocation2 + $0x60] sm:$0xff]
        %v847 = vld [vmem:[#allocation2 + $0x68] sm:$0xff]
        %v848 = vld [vmem:[#allocation2 + $0x70] sm:$0xff]
        %v849 = vld [vmem:[#allocation2 + $0x78] sm:$0xff]
        %s850 = scalar_lea.vmem [#allocation3], 192
        %v851 = vld [vmem:[%s850] sm:$0xff]
        %v852 = vld [vmem:[%s850 + $0x8] sm:$0xff]
        %v853 = vld [vmem:[%s850 + $0x10] sm:$0xff]
        %v854 = vld [vmem:[%s850 + $0x18] sm:$0xff]
        %v855 = vld [vmem:[%s850 + $0x20] sm:$0xff]
        %v856 = vld [vmem:[%s850 + $0x28] sm:$0xff]
        %v857 = vld [vmem:[%s850 + $0x30] sm:$0xff]
        %v858 = vld [vmem:[%s850 + $0x38] sm:$0xff]
        %859 = vmatprep.subr.mxu0 0.0
        %860 = vmatpush1.msra.mxu0 %v849
        %861 = vmatprep.subr.mxu0 0.0
        %862 = vmatpush1.msra.mxu0 %v848
        %863 = vmatprep.subr.mxu0 0.0
        %864 = vmatpush1.msra.mxu0 %v847
        %865 = vmatprep.subr.mxu0 0.0
        %866 = vmatpush1.msra.mxu0 %v846
        %867 = vmatprep.subr.mxu0 0.0
        %868 = vmatpush1.msra.mxu0 %v845
        %869 = vmatprep.subr.mxu0 0.0
        %870 = vmatpush1.msra.mxu0 %v844
        %871 = vmatprep.subr.mxu0 0.0
        %872 = vmatpush1.msra.mxu0 %v843
        %873 = vmatprep.subr.mxu0 0.0
        %874 = vmatpush1.msra.mxu0 %v842
        %875 = vmatprep.subr.mxu0 0.0
        %876 = vmatpush1.msra.mxu0 %v841
        %877 = vmatprep.subr.mxu0 0.0
        %878 = vmatpush1.msra.mxu0 %v840
        %879 = vmatprep.subr.mxu0 0.0
        %880 = vmatpush1.msra.mxu0 %v839
        %881 = vmatprep.subr.mxu0 0.0
        %882 = vmatpush1.msra.mxu0 %v838
        %883 = vmatprep.subr.mxu0 0.0
        %884 = vmatpush1.msra.mxu0 %v837
        %885 = vmatprep.subr.mxu0 0.0
        %886 = vmatpush1.msra.mxu0 %v836
        %887 = vmatprep.subr.mxu0 0.0
        %888 = vmatpush1.msra.mxu0 %v835
        %889 = vmatprep.subr.mxu0 0.0
        %890 = vmatpush1.msra.mxu0 %v834
        %891 = vmatprep.subr.mxu0 0.0
        %892 = vmatpush2.msra.mxu0 0.0
        %893 = vmatprep.subr.mxu0 0.0
        %894 = vmatpush2.msra.mxu0 0.0
        %895 = vmatprep.subr.mxu0 0.0
        %896 = vmatpush2.msra.mxu0 0.0
        %897 = vmatprep.subr.mxu0 0.0
        %898 = vmatpush2.msra.mxu0 0.0
        %899 = vmatprep.subr.mxu0 0.0
        %900 = vmatpush2.msra.mxu0 0.0
        %901 = vmatprep.subr.mxu0 0.0
        %902 = vmatpush2.msra.mxu0 0.0
        %903 = vmatprep.subr.mxu0 0.0
        %904 = vmatpush2.msra.mxu0 0.0
        %905 = vmatprep.subr.mxu0 0.0
        %906 = vmatpush2.msra.mxu0 0.0
        %907 = vmatprep.subr.mxu0 0.0
        %908 = vmatpush2.msra.mxu0 0.0
        %909 = vmatprep.subr.mxu0 0.0
        %910 = vmatpush2.msra.mxu0 0.0
        %911 = vmatprep.subr.mxu0 0.0
        %912 = vmatpush2.msra.mxu0 0.0
        %913 = vmatprep.subr.mxu0 0.0
        %914 = vmatpush2.msra.mxu0 0.0
        %915 = vmatprep.subr.mxu0 0.0
        %916 = vmatpush2.msra.mxu0 0.0
        %917 = vmatprep.subr.mxu0 0.0
        %918 = vmatpush2.msra.mxu0 0.0
        %919 = vmatprep.subr.mxu0 0.0
        %920 = vmatpush2.msra.mxu0 0.0
        %921 = vmatprep.subr.mxu0 0.0
        %922 = vmatpush2.msra.mxu0 0.0
        %923 = vmatprep.mubr.f32.mxu0 0.0
        %924 = vmatmul.mubr.f32.gmra.mxu0 %v851
        %v925 = vpop.f32.mrf.mxu0
        %v926 = vadd.f32 0.0, %v925
        %v927 = vpop.f32.mrf.mxu0
        %928 = vmatprep.mubr.f32.mxu0 0.0
        %929 = vmatmul.mubr.f32.gmra.mxu0 %v852
        %v930 = vpop.f32.mrf.mxu0
        %v931 = vadd.f32 0.0, %v930
        %v932 = vpop.f32.mrf.mxu0
        %933 = vmatprep.mubr.f32.mxu0 0.0
        %934 = vmatmul.mubr.f32.gmra.mxu0 %v853
        %v935 = vpop.f32.mrf.mxu0
        %v936 = vadd.f32 0.0, %v935
        %v937 = vpop.f32.mrf.mxu0
        %938 = vmatprep.mubr.f32.mxu0 0.0
        %939 = vmatmul.mubr.f32.gmra.mxu0 %v854
        %v940 = vpop.f32.mrf.mxu0
        %v941 = vadd.f32 0.0, %v940
        %v942 = vpop.f32.mrf.mxu0
        %943 = vmatprep.mubr.f32.mxu0 0.0
        %944 = vmatmul.mubr.f32.gmra.mxu0 %v855
        %v945 = vpop.f32.mrf.mxu0
        %v946 = vadd.f32 0.0, %v945
        %v947 = vpop.f32.mrf.mxu0
        %948 = vmatprep.mubr.f32.mxu0 0.0
        %949 = vmatmul.mubr.f32.gmra.mxu0 %v856
        %v950 = vpop.f32.mrf.mxu0
        %v951 = vadd.f32 0.0, %v950
        %v952 = vpop.f32.mrf.mxu0
        %953 = vmatprep.mubr.f32.mxu0 0.0
        %954 = vmatmul.mubr.f32.gmra.mxu0 %v857
        %v955 = vpop.f32.mrf.mxu0
        %v956 = vadd.f32 0.0, %v955
        %v957 = vpop.f32.mrf.mxu0
        %958 = vmatprep.mubr.f32.mxu0 0.0
        %959 = vmatmul.mubr.f32.gmra.mxu0 %v858
        %v960 = vpop.f32.mrf.mxu0
        %v961 = vadd.f32 0.0, %v960
        %v962 = vpop.f32.mrf.mxu0
        %963 = vdwg.mxu0
        %v964 = vmul.f32 %v926, 1.442695
        %v965 = vpow.pop %v964
        %v966 = vmul.f32 %v931, 1.442695
        %v967 = vpow.pop %v966
        %v968 = vmul.f32 %v936, 1.442695
        %v969 = vpow.pop %v968
        %v970 = vmul.f32 %v941, 1.442695
        %v971 = vpow.pop %v970
        %vm972 = vcmp.gt.f32.partialorder %v926, 0.0
        %vm973 = vcmp.gt.f32.partialorder %v931, 0.0
        %vm974 = vcmp.gt.f32.partialorder %v936, 0.0
        %vm975 = vcmp.gt.f32.partialorder %v941, 0.0
        %v976 = vsub.f32 %v965, 1.0
        %v977 = vsub.f32 %v967, 1.0
        %v978 = vsub.f32 %v969, 1.0
        %v979 = vsub.f32 %v971, 1.0
        %v980 = vmul.f32 %v976, 1.6732632
        %v981 = vmul.f32 %v977, 1.6732632
        %v982 = vmul.f32 %v978, 1.6732632
        %v983 = vmul.f32 %v979, 1.6732632
        %v984 = vsel %vm972, %v926, %v980
        %v985 = vsel %vm973, %v931, %v981
        %v986 = vsel %vm974, %v936, %v982
        %v987 = vsel %vm975, %v941, %v983
        %v988 = vmul.f32 %v984, 1.050701
        %v989 = vmul.f32 %v985, 1.050701
        %v990 = vmul.f32 %v986, 1.050701
        %v991 = vmul.f32 %v987, 1.050701
        %v992 = vmul.f32 %v965, 1.6732632
        %v993 = vmul.f32 %v967, 1.6732632
        %v994 = vmul.f32 %v969, 1.6732632
        %v995 = vmul.f32 %v971, 1.6732632
        %v996 = vsel %vm972, 1.0, %v992
        %v997 = vsel %vm973, 1.0, %v993
        %v998 = vsel %vm974, 1.0, %v994
        %v999 = vsel %vm975, 1.0, %v995
        %v1000 = vmul.f32 %v996, 1.050701
        %v1001 = vmul.f32 %v997, 1.050701
        %v1002 = vmul.f32 %v998, 1.050701
        %v1003 = vmul.f32 %v999, 1.050701
        %v1004 = vmul.f32 %v946, %v1000
        %v1005 = vmul.f32 %v951, %v1001
        %v1006 = vmul.f32 %v956, %v1002
        %v1007 = vmul.f32 %v961, %v1003
        %v1008 = vmul.f32 %v1004, %v1000
        %v1009 = vmul.f32 %v1005, %v1001
        %v1010 = vmul.f32 %v1006, %v1002
        %v1011 = vmul.f32 %v1007, %v1003
        %1012 = vst [vmem:[#allocation2] sm:$0xff] %v988
        %1013 = vst [vmem:[#allocation2 + $0x8] sm:$0xff] %v989
        %1014 = vst [vmem:[#allocation2 + $0x10] sm:$0xff] %v990
        %1015 = vst [vmem:[#allocation2 + $0x18] sm:$0xff] %v991
        %v1016 = vmul.f32 %v988, %v988
        %v1017 = vmul.f32 %v989, %v989
        %v1018 = vmul.f32 %v990, %v990
        %v1019 = vmul.f32 %v991, %v991
        %v1020 = vadd.f32 %v1016, %v1008
        %v1021 = vadd.f32 %v1017, %v1009
        %v1022 = vadd.f32 %v1018, %v1010
        %v1023 = vadd.f32 %v1019, %v1011
        %1024 = vst [vmem:[#allocation2 + $0x20] sm:$0xff] %v1020
        %1025 = vst [vmem:[#allocation2 + $0x28] sm:$0xff] %v1021
        %1026 = vst [vmem:[#allocation2 + $0x30] sm:$0xff] %v1022
        %1027 = vst [vmem:[#allocation2 + $0x38] sm:$0xff] %v1023
        %1028 = vst [vmem:[#allocation2 + $0x40] sm:$0xff] %v1008
        %1029 = vst [vmem:[#allocation2 + $0x48] sm:$0xff] %v1009
        %1030 = vst [vmem:[#allocation2 + $0x50] sm:$0xff] %v1010
        %1031 = vst [vmem:[#allocation2 + $0x58] sm:$0xff] %v1011
        %v1032 = vld [vmem:[#allocation2] sm:$0xff]
        %v1033 = vld [vmem:[#allocation2 + $0x8] sm:$0xff]
        %v1034 = vld [vmem:[#allocation2 + $0x10] sm:$0xff]
        %v1035 = vld [vmem:[#allocation2 + $0x18] sm:$0xff]
        %v1036 = vld [vmem:[#allocation2 + $0x20] sm:$0xff]
        %v1037 = vld [vmem:[#allocation2 + $0x28] sm:$0xff]
        %v1038 = vld [vmem:[#allocation2 + $0x30] sm:$0xff]
        %v1039 = vld [vmem:[#allocation2 + $0x38] sm:$0xff]
        %v1040 = vld [vmem:[#allocation2 + $0x40] sm:$0xff]
        %v1041 = vld [vmem:[#allocation2 + $0x48] sm:$0xff]
        %v1042 = vld [vmem:[#allocation2 + $0x50] sm:$0xff]
        %v1043 = vld [vmem:[#allocation2 + $0x58] sm:$0xff]
        %v1044 = vld [vmem:[#allocation2 + $0x60] sm:$0xff]
        %v1045 = vld [vmem:[#allocation2 + $0x68] sm:$0xff]
        %v1046 = vld [vmem:[#allocation2 + $0x70] sm:$0xff]
        %v1047 = vld [vmem:[#allocation2 + $0x78] sm:$0xff]
        %s1048 = scalar_lea.vmem [#allocation3], 256
        %v1049 = vld [vmem:[%s1048] sm:$0xff]
        %v1050 = vld [vmem:[%s1048 + $0x8] sm:$0xff]
        %v1051 = vld [vmem:[%s1048 + $0x10] sm:$0xff]
        %v1052 = vld [vmem:[%s1048 + $0x18] sm:$0xff]
        %v1053 = vld [vmem:[%s1048 + $0x20] sm:$0xff]
        %v1054 = vld [vmem:[%s1048 + $0x28] sm:$0xff]
        %v1055 = vld [vmem:[%s1048 + $0x30] sm:$0xff]
        %v1056 = vld [vmem:[%s1048 + $0x38] sm:$0xff]
        %1057 = vmatprep.subr.mxu0 0.0
        %1058 = vmatpush1.msra.mxu0 %v1047
        %1059 = vmatprep.subr.mxu0 0.0
        %1060 = vmatpush1.msra.mxu0 %v1046
        %1061 = vmatprep.subr.mxu0 0.0
        %1062 = vmatpush1.msra.mxu0 %v1045
        %1063 = vmatprep.subr.mxu0 0.0
        %1064 = vmatpush1.msra.mxu0 %v1044
        %1065 = vmatprep.subr.mxu0 0.0
        %1066 = vmatpush1.msra.mxu0 %v1043
        %1067 = vmatprep.subr.mxu0 0.0
        %1068 = vmatpush1.msra.mxu0 %v1042
        %1069 = vmatprep.subr.mxu0 0.0
        %1070 = vmatpush1.msra.mxu0 %v1041
        %1071 = vmatprep.subr.mxu0 0.0
        %1072 = vmatpush1.msra.mxu0 %v1040
        %1073 = vmatprep.subr.mxu0 0.0
        %1074 = vmatpush1.msra.mxu0 %v1039
        %1075 = vmatprep.subr.mxu0 0.0
        %1076 = vmatpush1.msra.mxu0 %v1038
        %1077 = vmatprep.subr.mxu0 0.0
        %1078 = vmatpush1.msra.mxu0 %v1037
        %1079 = vmatprep.subr.mxu0 0.0
        %1080 = vmatpush1.msra.mxu0 %v1036
        %1081 = vmatprep.subr.mxu0 0.0
        %1082 = vmatpush1.msra.mxu0 %v1035
        %1083 = vmatprep.subr.mxu0 0.0
        %1084 = vmatpush1.msra.mxu0 %v1034
        %1085 = vmatprep.subr.mxu0 0.0
        %1086 = vmatpush1.msra.mxu0 %v1033
        %1087 = vmatprep.subr.mxu0 0.0
        %1088 = vmatpush1.msra.mxu0 %v1032
        %1089 = vmatprep.subr.mxu0 0.0
        %1090 = vmatpush2.msra.mxu0 0.0
        %1091 = vmatprep.subr.mxu0 0.0
        %1092 = vmatpush2.msra.mxu0 0.0
        %1093 = vmatprep.subr.mxu0 0.0
        %1094 = vmatpush2.msra.mxu0 0.0
        %1095 = vmatprep.subr.mxu0 0.0
        %1096 = vmatpush2.msra.mxu0 0.0
        %1097 = vmatprep.subr.mxu0 0.0
        %1098 = vmatpush2.msra.mxu0 0.0
        %1099 = vmatprep.subr.mxu0 0.0
        %1100 = vmatpush2.msra.mxu0 0.0
        %1101 = vmatprep.subr.mxu0 0.0
        %1102 = vmatpush2.msra.mxu0 0.0
        %1103 = vmatprep.subr.mxu0 0.0
        %1104 = vmatpush2.msra.mxu0 0.0
        %1105 = vmatprep.subr.mxu0 0.0
        %1106 = vmatpush2.msra.mxu0 0.0
        %1107 = vmatprep.subr.mxu0 0.0
        %1108 = vmatpush2.msra.mxu0 0.0
        %1109 = vmatprep.subr.mxu0 0.0
        %1110 = vmatpush2.msra.mxu0 0.0
        %1111 = vmatprep.subr.mxu0 0.0
        %1112 = vmatpush2.msra.mxu0 0.0
        %1113 = vmatprep.subr.mxu0 0.0
        %1114 = vmatpush2.msra.mxu0 0.0
        %1115 = vmatprep.subr.mxu0 0.0
        %1116 = vmatpush2.msra.mxu0 0.0
        %1117 = vmatprep.subr.mxu0 0.0
        %1118 = vmatpush2.msra.mxu0 0.0
        %1119 = vmatprep.subr.mxu0 0.0
        %1120 = vmatpush2.msra.mxu0 0.0
        %1121 = vmatprep.mubr.f32.mxu0 0.0
        %1122 = vmatmul.mubr.f32.gmra.mxu0 %v1049
        %v1123 = vpop.f32.mrf.mxu0
        %v1124 = vadd.f32 0.0, %v1123
        %v1125 = vpop.f32.mrf.mxu0
        %1126 = vmatprep.mubr.f32.mxu0 0.0
        %1127 = vmatmul.mubr.f32.gmra.mxu0 %v1050
        %v1128 = vpop.f32.mrf.mxu0
        %v1129 = vadd.f32 0.0, %v1128
        %v1130 = vpop.f32.mrf.mxu0
        %1131 = vmatprep.mubr.f32.mxu0 0.0
        %1132 = vmatmul.mubr.f32.gmra.mxu0 %v1051
        %v1133 = vpop.f32.mrf.mxu0
        %v1134 = vadd.f32 0.0, %v1133
        %v1135 = vpop.f32.mrf.mxu0
        %1136 = vmatprep.mubr.f32.mxu0 0.0
        %1137 = vmatmul.mubr.f32.gmra.mxu0 %v1052
        %v1138 = vpop.f32.mrf.mxu0
        %v1139 = vadd.f32 0.0, %v1138
        %v1140 = vpop.f32.mrf.mxu0
        %1141 = vmatprep.mubr.f32.mxu0 0.0
        %1142 = vmatmul.mubr.f32.gmra.mxu0 %v1053
        %v1143 = vpop.f32.mrf.mxu0
        %v1144 = vadd.f32 0.0, %v1143
        %v1145 = vpop.f32.mrf.mxu0
        %1146 = vmatprep.mubr.f32.mxu0 0.0
        %1147 = vmatmul.mubr.f32.gmra.mxu0 %v1054
        %v1148 = vpop.f32.mrf.mxu0
        %v1149 = vadd.f32 0.0, %v1148
        %v1150 = vpop.f32.mrf.mxu0
        %1151 = vmatprep.mubr.f32.mxu0 0.0
        %1152 = vmatmul.mubr.f32.gmra.mxu0 %v1055
        %v1153 = vpop.f32.mrf.mxu0
        %v1154 = vadd.f32 0.0, %v1153
        %v1155 = vpop.f32.mrf.mxu0
        %1156 = vmatprep.mubr.f32.mxu0 0.0
        %1157 = vmatmul.mubr.f32.gmra.mxu0 %v1056
        %v1158 = vpop.f32.mrf.mxu0
        %v1159 = vadd.f32 0.0, %v1158
        %v1160 = vpop.f32.mrf.mxu0
        %1161 = vdwg.mxu0
        %v1162 = vmul.f32 %v1124, 1.442695
        %v1163 = vpow.pop %v1162
        %v1164 = vmul.f32 %v1129, 1.442695
        %v1165 = vpow.pop %v1164
        %v1166 = vmul.f32 %v1134, 1.442695
        %v1167 = vpow.pop %v1166
        %v1168 = vmul.f32 %v1139, 1.442695
        %v1169 = vpow.pop %v1168
        %vm1170 = vcmp.gt.f32.partialorder %v1124, 0.0
        %vm1171 = vcmp.gt.f32.partialorder %v1129, 0.0
        %vm1172 = vcmp.gt.f32.partialorder %v1134, 0.0
        %vm1173 = vcmp.gt.f32.partialorder %v1139, 0.0
        %v1174 = vsub.f32 %v1163, 1.0
        %v1175 = vsub.f32 %v1165, 1.0
        %v1176 = vsub.f32 %v1167, 1.0
        %v1177 = vsub.f32 %v1169, 1.0
        %v1178 = vmul.f32 %v1174, 1.6732632
        %v1179 = vmul.f32 %v1175, 1.6732632
        %v1180 = vmul.f32 %v1176, 1.6732632
        %v1181 = vmul.f32 %v1177, 1.6732632
        %v1182 = vsel %vm1170, %v1124, %v1178
        %v1183 = vsel %vm1171, %v1129, %v1179
        %v1184 = vsel %vm1172, %v1134, %v1180
        %v1185 = vsel %vm1173, %v1139, %v1181
        %v1186 = vmul.f32 %v1182, 1.050701
        %v1187 = vmul.f32 %v1183, 1.050701
        %v1188 = vmul.f32 %v1184, 1.050701
        %v1189 = vmul.f32 %v1185, 1.050701
        %v1190 = vmul.f32 %v1163, 1.6732632
        %v1191 = vmul.f32 %v1165, 1.6732632
        %v1192 = vmul.f32 %v1167, 1.6732632
        %v1193 = vmul.f32 %v1169, 1.6732632
        %v1194 = vsel %vm1170, 1.0, %v1190
        %v1195 = vsel %vm1171, 1.0, %v1191
        %v1196 = vsel %vm1172, 1.0, %v1192
        %v1197 = vsel %vm1173, 1.0, %v1193
        %v1198 = vmul.f32 %v1194, 1.050701
        %v1199 = vmul.f32 %v1195, 1.050701
        %v1200 = vmul.f32 %v1196, 1.050701
        %v1201 = vmul.f32 %v1197, 1.050701
        %v1202 = vmul.f32 %v1144, %v1198
        %v1203 = vmul.f32 %v1149, %v1199
        %v1204 = vmul.f32 %v1154, %v1200
        %v1205 = vmul.f32 %v1159, %v1201
        %v1206 = vmul.f32 %v1202, %v1198
        %v1207 = vmul.f32 %v1203, %v1199
        %v1208 = vmul.f32 %v1204, %v1200
        %v1209 = vmul.f32 %v1205, %v1201
        %1210 = vst [vmem:[#allocation2] sm:$0xff] %v1186
        %1211 = vst [vmem:[#allocation2 + $0x8] sm:$0xff] %v1187
        %1212 = vst [vmem:[#allocation2 + $0x10] sm:$0xff] %v1188
        %1213 = vst [vmem:[#allocation2 + $0x18] sm:$0xff] %v1189
        %v1214 = vmul.f32 %v1186, %v1186
        %v1215 = vmul.f32 %v1187, %v1187
        %v1216 = vmul.f32 %v1188, %v1188
        %v1217 = vmul.f32 %v1189, %v1189
        %v1218 = vadd.f32 %v1214, %v1206
        %v1219 = vadd.f32 %v1215, %v1207
        %v1220 = vadd.f32 %v1216, %v1208
        %v1221 = vadd.f32 %v1217, %v1209
        %1222 = vst [vmem:[#allocation2 + $0x20] sm:$0xff] %v1218
        %1223 = vst [vmem:[#allocation2 + $0x28] sm:$0xff] %v1219
        %1224 = vst [vmem:[#allocation2 + $0x30] sm:$0xff] %v1220
        %1225 = vst [vmem:[#allocation2 + $0x38] sm:$0xff] %v1221
        %1226 = vst [vmem:[#allocation2 + $0x40] sm:$0xff] %v1206
        %1227 = vst [vmem:[#allocation2 + $0x48] sm:$0xff] %v1207
        %1228 = vst [vmem:[#allocation2 + $0x50] sm:$0xff] %v1208
        %1229 = vst [vmem:[#allocation2 + $0x58] sm:$0xff] %v1209
        %v1230 = vld [vmem:[#allocation2] sm:$0xff]
        %v1231 = vld [vmem:[#allocation2 + $0x8] sm:$0xff]
        %v1232 = vld [vmem:[#allocation2 + $0x10] sm:$0xff]
        %v1233 = vld [vmem:[#allocation2 + $0x18] sm:$0xff]
        %v1234 = vld [vmem:[#allocation2 + $0x20] sm:$0xff]
        %v1235 = vld [vmem:[#allocation2 + $0x28] sm:$0xff]
        %v1236 = vld [vmem:[#allocation2 + $0x30] sm:$0xff]
        %v1237 = vld [vmem:[#allocation2 + $0x38] sm:$0xff]
        %v1238 = vld [vmem:[#allocation2 + $0x40] sm:$0xff]
        %v1239 = vld [vmem:[#allocation2 + $0x48] sm:$0xff]
        %v1240 = vld [vmem:[#allocation2 + $0x50] sm:$0xff]
        %v1241 = vld [vmem:[#allocation2 + $0x58] sm:$0xff]
        %v1242 = vld [vmem:[#allocation2 + $0x60] sm:$0xff]
        %v1243 = vld [vmem:[#allocation2 + $0x68] sm:$0xff]
        %v1244 = vld [vmem:[#allocation2 + $0x70] sm:$0xff]
        %v1245 = vld [vmem:[#allocation2 + $0x78] sm:$0xff]
        %s1246 = scalar_lea.vmem [#allocation3], 320
        %v1247 = vld [vmem:[%s1246] sm:$0xff]
        %v1248 = vld [vmem:[%s1246 + $0x8] sm:$0xff]
        %v1249 = vld [vmem:[%s1246 + $0x10] sm:$0xff]
        %v1250 = vld [vmem:[%s1246 + $0x18] sm:$0xff]
        %v1251 = vld [vmem:[%s1246 + $0x20] sm:$0xff]
        %v1252 = vld [vmem:[%s1246 + $0x28] sm:$0xff]
        %v1253 = vld [vmem:[%s1246 + $0x30] sm:$0xff]
        %v1254 = vld [vmem:[%s1246 + $0x38] sm:$0xff]
        %1255 = vmatprep.subr.mxu0 0.0
        %1256 = vmatpush1.msra.mxu0 %v1245
        %1257 = vmatprep.subr.mxu0 0.0
        %1258 = vmatpush1.msra.mxu0 %v1244
        %1259 = vmatprep.subr.mxu0 0.0
        %1260 = vmatpush1.msra.mxu0 %v1243
        %1261 = vmatprep.subr.mxu0 0.0
        %1262 = vmatpush1.msra.mxu0 %v1242
        %1263 = vmatprep.subr.mxu0 0.0
        %1264 = vmatpush1.msra.mxu0 %v1241
        %1265 = vmatprep.subr.mxu0 0.0
        %1266 = vmatpush1.msra.mxu0 %v1240
        %1267 = vmatprep.subr.mxu0 0.0
        %1268 = vmatpush1.msra.mxu0 %v1239
        %1269 = vmatprep.subr.mxu0 0.0
        %1270 = vmatpush1.msra.mxu0 %v1238
        %1271 = vmatprep.subr.mxu0 0.0
        %1272 = vmatpush1.msra.mxu0 %v1237
        %1273 = vmatprep.subr.mxu0 0.0
        %1274 = vmatpush1.msra.mxu0 %v1236
        %1275 = vmatprep.subr.mxu0 0.0
        %1276 = vmatpush1.msra.mxu0 %v1235
        %1277 = vmatprep.subr.mxu0 0.0
        %1278 = vmatpush1.msra.mxu0 %v1234
        %1279 = vmatprep.subr.mxu0 0.0
        %1280 = vmatpush1.msra.mxu0 %v1233
        %1281 = vmatprep.subr.mxu0 0.0
        %1282 = vmatpush1.msra.mxu0 %v1232
        %1283 = vmatprep.subr.mxu0 0.0
        %1284 = vmatpush1.msra.mxu0 %v1231
        %1285 = vmatprep.subr.mxu0 0.0
        %1286 = vmatpush1.msra.mxu0 %v1230
        %1287 = vmatprep.subr.mxu0 0.0
        %1288 = vmatpush2.msra.mxu0 0.0
        %1289 = vmatprep.subr.mxu0 0.0
        %1290 = vmatpush2.msra.mxu0 0.0
        %1291 = vmatprep.subr.mxu0 0.0
        %1292 = vmatpush2.msra.mxu0 0.0
        %1293 = vmatprep.subr.mxu0 0.0
        %1294 = vmatpush2.msra.mxu0 0.0
        %1295 = vmatprep.subr.mxu0 0.0
        %1296 = vmatpush2.msra.mxu0 0.0
        %1297 = vmatprep.subr.mxu0 0.0
        %1298 = vmatpush2.msra.mxu0 0.0
        %1299 = vmatprep.subr.mxu0 0.0
        %1300 = vmatpush2.msra.mxu0 0.0
        %1301 = vmatprep.subr.mxu0 0.0
        %1302 = vmatpush2.msra.mxu0 0.0
        %1303 = vmatprep.subr.mxu0 0.0
        %1304 = vmatpush2.msra.mxu0 0.0
        %1305 = vmatprep.subr.mxu0 0.0
        %1306 = vmatpush2.msra.mxu0 0.0
        %1307 = vmatprep.subr.mxu0 0.0
        %1308 = vmatpush2.msra.mxu0 0.0
        %1309 = vmatprep.subr.mxu0 0.0
        %1310 = vmatpush2.msra.mxu0 0.0
        %1311 = vmatprep.subr.mxu0 0.0
        %1312 = vmatpush2.msra.mxu0 0.0
        %1313 = vmatprep.subr.mxu0 0.0
        %1314 = vmatpush2.msra.mxu0 0.0
        %1315 = vmatprep.subr.mxu0 0.0
        %1316 = vmatpush2.msra.mxu0 0.0
        %1317 = vmatprep.subr.mxu0 0.0
        %1318 = vmatpush2.msra.mxu0 0.0
        %1319 = vmatprep.mubr.f32.mxu0 0.0
        %1320 = vmatmul.mubr.f32.gmra.mxu0 %v1247
        %v1321 = vpop.f32.mrf.mxu0
        %v1322 = vadd.f32 0.0, %v1321
        %v1323 = vpop.f32.mrf.mxu0
        %1324 = vmatprep.mubr.f32.mxu0 0.0
        %1325 = vmatmul.mubr.f32.gmra.mxu0 %v1248
        %v1326 = vpop.f32.mrf.mxu0
        %v1327 = vadd.f32 0.0, %v1326
        %v1328 = vpop.f32.mrf.mxu0
        %1329 = vmatprep.mubr.f32.mxu0 0.0
        %1330 = vmatmul.mubr.f32.gmra.mxu0 %v1249
        %v1331 = vpop.f32.mrf.mxu0
        %v1332 = vadd.f32 0.0, %v1331
        %v1333 = vpop.f32.mrf.mxu0
        %1334 = vmatprep.mubr.f32.mxu0 0.0
        %1335 = vmatmul.mubr.f32.gmra.mxu0 %v1250
        %v1336 = vpop.f32.mrf.mxu0
        %v1337 = vadd.f32 0.0, %v1336
        %v1338 = vpop.f32.mrf.mxu0
        %1339 = vmatprep.mubr.f32.mxu0 0.0
        %1340 = vmatmul.mubr.f32.gmra.mxu0 %v1251
        %v1341 = vpop.f32.mrf.mxu0
        %v1342 = vadd.f32 0.0, %v1341
        %v1343 = vpop.f32.mrf.mxu0
        %1344 = vmatprep.mubr.f32.mxu0 0.0
        %1345 = vmatmul.mubr.f32.gmra.mxu0 %v1252
        %v1346 = vpop.f32.mrf.mxu0
        %v1347 = vadd.f32 0.0, %v1346
        %v1348 = vpop.f32.mrf.mxu0
        %1349 = vmatprep.mubr.f32.mxu0 0.0
        %1350 = vmatmul.mubr.f32.gmra.mxu0 %v1253
        %v1351 = vpop.f32.mrf.mxu0
        %v1352 = vadd.f32 0.0, %v1351
        %v1353 = vpop.f32.mrf.mxu0
        %1354 = vmatprep.mubr.f32.mxu0 0.0
        %1355 = vmatmul.mubr.f32.gmra.mxu0 %v1254
        %v1356 = vpop.f32.mrf.mxu0
        %v1357 = vadd.f32 0.0, %v1356
        %v1358 = vpop.f32.mrf.mxu0
        %1359 = vdwg.mxu0
        %v1360 = vmul.f32 %v1322, 1.442695
        %v1361 = vpow.pop %v1360
        %v1362 = vmul.f32 %v1327, 1.442695
        %v1363 = vpow.pop %v1362
        %v1364 = vmul.f32 %v1332, 1.442695
        %v1365 = vpow.pop %v1364
        %v1366 = vmul.f32 %v1337, 1.442695
        %v1367 = vpow.pop %v1366
        %vm1368 = vcmp.gt.f32.partialorder %v1322, 0.0
        %vm1369 = vcmp.gt.f32.partialorder %v1327, 0.0
        %vm1370 = vcmp.gt.f32.partialorder %v1332, 0.0
        %vm1371 = vcmp.gt.f32.partialorder %v1337, 0.0
        %v1372 = vsub.f32 %v1361, 1.0
        %v1373 = vsub.f32 %v1363, 1.0
        %v1374 = vsub.f32 %v1365, 1.0
        %v1375 = vsub.f32 %v1367, 1.0
        %v1376 = vmul.f32 %v1372, 1.6732632
        %v1377 = vmul.f32 %v1373, 1.6732632
        %v1378 = vmul.f32 %v1374, 1.6732632
        %v1379 = vmul.f32 %v1375, 1.6732632
        %v1380 = vsel %vm1368, %v1322, %v1376
        %v1381 = vsel %vm1369, %v1327, %v1377
        %v1382 = vsel %vm1370, %v1332, %v1378
        %v1383 = vsel %vm1371, %v1337, %v1379
        %v1384 = vmul.f32 %v1380, 1.050701
        %v1385 = vmul.f32 %v1381, 1.050701
        %v1386 = vmul.f32 %v1382, 1.050701
        %v1387 = vmul.f32 %v1383, 1.050701
        %v1388 = vmul.f32 %v1361, 1.6732632
        %v1389 = vmul.f32 %v1363, 1.6732632
        %v1390 = vmul.f32 %v1365, 1.6732632
        %v1391 = vmul.f32 %v1367, 1.6732632
        %v1392 = vsel %vm1368, 1.0, %v1388
        %v1393 = vsel %vm1369, 1.0, %v1389
        %v1394 = vsel %vm1370, 1.0, %v1390
        %v1395 = vsel %vm1371, 1.0, %v1391
        %v1396 = vmul.f32 %v1392, 1.050701
        %v1397 = vmul.f32 %v1393, 1.050701
        %v1398 = vmul.f32 %v1394, 1.050701
        %v1399 = vmul.f32 %v1395, 1.050701
        %v1400 = vmul.f32 %v1342, %v1396
        %v1401 = vmul.f32 %v1347, %v1397
        %v1402 = vmul.f32 %v1352, %v1398
        %v1403 = vmul.f32 %v1357, %v1399
        %v1404 = vmul.f32 %v1400, %v1396
        %v1405 = vmul.f32 %v1401, %v1397
        %v1406 = vmul.f32 %v1402, %v1398
        %v1407 = vmul.f32 %v1403, %v1399
        %1408 = vst [vmem:[#allocation2] sm:$0xff] %v1384
        %1409 = vst [vmem:[#allocation2 + $0x8] sm:$0xff] %v1385
        %1410 = vst [vmem:[#allocation2 + $0x10] sm:$0xff] %v1386
        %1411 = vst [vmem:[#allocation2 + $0x18] sm:$0xff] %v1387
        %v1412 = vmul.f32 %v1384, %v1384
        %v1413 = vmul.f32 %v1385, %v1385
        %v1414 = vmul.f32 %v1386, %v1386
        %v1415 = vmul.f32 %v1387, %v1387
        %v1416 = vadd.f32 %v1412, %v1404
        %v1417 = vadd.f32 %v1413, %v1405
        %v1418 = vadd.f32 %v1414, %v1406
        %v1419 = vadd.f32 %v1415, %v1407
        %1420 = vst [vmem:[#allocation2 + $0x20] sm:$0xff] %v1416
        %1421 = vst [vmem:[#allocation2 + $0x28] sm:$0xff] %v1417
        %1422 = vst [vmem:[#allocation2 + $0x30] sm:$0xff] %v1418
        %1423 = vst [vmem:[#allocation2 + $0x38] sm:$0xff] %v1419
        %1424 = vst [vmem:[#allocation2 + $0x40] sm:$0xff] %v1404
        %1425 = vst [vmem:[#allocation2 + $0x48] sm:$0xff] %v1405
        %1426 = vst [vmem:[#allocation2 + $0x50] sm:$0xff] %v1406
        %1427 = vst [vmem:[#allocation2 + $0x58] sm:$0xff] %v1407
        %v1428 = vld [vmem:[#allocation2] sm:$0xff]
        %v1429 = vld [vmem:[#allocation2 + $0x8] sm:$0xff]
        %v1430 = vld [vmem:[#allocation2 + $0x10] sm:$0xff]
        %v1431 = vld [vmem:[#allocation2 + $0x18] sm:$0xff]
        %v1432 = vld [vmem:[#allocation2 + $0x20] sm:$0xff]
        %v1433 = vld [vmem:[#allocation2 + $0x28] sm:$0xff]
        %v1434 = vld [vmem:[#allocation2 + $0x30] sm:$0xff]
        %v1435 = vld [vmem:[#allocation2 + $0x38] sm:$0xff]
        %v1436 = vld [vmem:[#allocation2 + $0x40] sm:$0xff]
        %v1437 = vld [vmem:[#allocation2 + $0x48] sm:$0xff]
        %v1438 = vld [vmem:[#allocation2 + $0x50] sm:$0xff]
        %v1439 = vld [vmem:[#allocation2 + $0x58] sm:$0xff]
        %v1440 = vld [vmem:[#allocation2 + $0x60] sm:$0xff]
        %v1441 = vld [vmem:[#allocation2 + $0x68] sm:$0xff]
        %v1442 = vld [vmem:[#allocation2 + $0x70] sm:$0xff]
        %v1443 = vld [vmem:[#allocation2 + $0x78] sm:$0xff]
        %s1444 = scalar_lea.vmem [#allocation3], 384
        %v1445 = vld [vmem:[%s1444] sm:$0xff]
        %v1446 = vld [vmem:[%s1444 + $0x8] sm:$0xff]
        %v1447 = vld [vmem:[%s1444 + $0x10] sm:$0xff]
        %v1448 = vld [vmem:[%s1444 + $0x18] sm:$0xff]
        %v1449 = vld [vmem:[%s1444 + $0x20] sm:$0xff]
        %v1450 = vld [vmem:[%s1444 + $0x28] sm:$0xff]
        %v1451 = vld [vmem:[%s1444 + $0x30] sm:$0xff]
        %v1452 = vld [vmem:[%s1444 + $0x38] sm:$0xff]
        %1453 = vmatprep.subr.mxu0 0.0
        %1454 = vmatpush1.msra.mxu0 %v1443
        %1455 = vmatprep.subr.mxu0 0.0
        %1456 = vmatpush1.msra.mxu0 %v1442
        %1457 = vmatprep.subr.mxu0 0.0
        %1458 = vmatpush1.msra.mxu0 %v1441
        %1459 = vmatprep.subr.mxu0 0.0
        %1460 = vmatpush1.msra.mxu0 %v1440
        %1461 = vmatprep.subr.mxu0 0.0
        %1462 = vmatpush1.msra.mxu0 %v1439
        %1463 = vmatprep.subr.mxu0 0.0
        %1464 = vmatpush1.msra.mxu0 %v1438
        %1465 = vmatprep.subr.mxu0 0.0
        %1466 = vmatpush1.msra.mxu0 %v1437
        %1467 = vmatprep.subr.mxu0 0.0
        %1468 = vmatpush1.msra.mxu0 %v1436
        %1469 = vmatprep.subr.mxu0 0.0
        %1470 = vmatpush1.msra.mxu0 %v1435
        %1471 = vmatprep.subr.mxu0 0.0
        %1472 = vmatpush1.msra.mxu0 %v1434
        %1473 = vmatprep.subr.mxu0 0.0
        %1474 = vmatpush1.msra.mxu0 %v1433
        %1475 = vmatprep.subr.mxu0 0.0
        %1476 = vmatpush1.msra.mxu0 %v1432
        %1477 = vmatprep.subr.mxu0 0.0
        %1478 = vmatpush1.msra.mxu0 %v1431
        %1479 = vmatprep.subr.mxu0 0.0
        %1480 = vmatpush1.msra.mxu0 %v1430
        %1481 = vmatprep.subr.mxu0 0.0
        %1482 = vmatpush1.msra.mxu0 %v1429
        %1483 = vmatprep.subr.mxu0 0.0
        %1484 = vmatpush1.msra.mxu0 %v1428
        %1485 = vmatprep.subr.mxu0 0.0
        %1486 = vmatpush2.msra.mxu0 0.0
        %1487 = vmatprep.subr.mxu0 0.0
        %1488 = vmatpush2.msra.mxu0 0.0
        %1489 = vmatprep.subr.mxu0 0.0
        %1490 = vmatpush2.msra.mxu0 0.0
        %1491 = vmatprep.subr.mxu0 0.0
        %1492 = vmatpush2.msra.mxu0 0.0
        %1493 = vmatprep.subr.mxu0 0.0
        %1494 = vmatpush2.msra.mxu0 0.0
        %1495 = vmatprep.subr.mxu0 0.0
        %1496 = vmatpush2.msra.mxu0 0.0
        %1497 = vmatprep.subr.mxu0 0.0
        %1498 = vmatpush2.msra.mxu0 0.0
        %1499 = vmatprep.subr.mxu0 0.0
        %1500 = vmatpush2.msra.mxu0 0.0
        %1501 = vmatprep.subr.mxu0 0.0
        %1502 = vmatpush2.msra.mxu0 0.0
        %1503 = vmatprep.subr.mxu0 0.0
        %1504 = vmatpush2.msra.mxu0 0.0
        %1505 = vmatprep.subr.mxu0 0.0
        %1506 = vmatpush2.msra.mxu0 0.0
        %1507 = vmatprep.subr.mxu0 0.0
        %1508 = vmatpush2.msra.mxu0 0.0
        %1509 = vmatprep.subr.mxu0 0.0
        %1510 = vmatpush2.msra.mxu0 0.0
        %1511 = vmatprep.subr.mxu0 0.0
        %1512 = vmatpush2.msra.mxu0 0.0
        %1513 = vmatprep.subr.mxu0 0.0
        %1514 = vmatpush2.msra.mxu0 0.0
        %1515 = vmatprep.subr.mxu0 0.0
        %1516 = vmatpush2.msra.mxu0 0.0
        %1517 = vmatprep.mubr.f32.mxu0 0.0
        %1518 = vmatmul.mubr.f32.gmra.mxu0 %v1445
        %v1519 = vpop.f32.mrf.mxu0
        %v1520 = vadd.f32 0.0, %v1519
        %v1521 = vpop.f32.mrf.mxu0
        %1522 = vmatprep.mubr.f32.mxu0 0.0
        %1523 = vmatmul.mubr.f32.gmra.mxu0 %v1446
        %v1524 = vpop.f32.mrf.mxu0
        %v1525 = vadd.f32 0.0, %v1524
        %v1526 = vpop.f32.mrf.mxu0
        %1527 = vmatprep.mubr.f32.mxu0 0.0
        %1528 = vmatmul.mubr.f32.gmra.mxu0 %v1447
        %v1529 = vpop.f32.mrf.mxu0
        %v1530 = vadd.f32 0.0, %v1529
        %v1531 = vpop.f32.mrf.mxu0
        %1532 = vmatprep.mubr.f32.mxu0 0.0
        %1533 = vmatmul.mubr.f32.gmra.mxu0 %v1448
        %v1534 = vpop.f32.mrf.mxu0
        %v1535 = vadd.f32 0.0, %v1534
        %v1536 = vpop.f32.mrf.mxu0
        %1537 = vmatprep.mubr.f32.mxu0 0.0
        %1538 = vmatmul.mubr.f32.gmra.mxu0 %v1449
        %v1539 = vpop.f32.mrf.mxu0
        %v1540 = vadd.f32 0.0, %v1539
        %v1541 = vpop.f32.mrf.mxu0
        %1542 = vmatprep.mubr.f32.mxu0 0.0
        %1543 = vmatmul.mubr.f32.gmra.mxu0 %v1450
        %v1544 = vpop.f32.mrf.mxu0
        %v1545 = vadd.f32 0.0, %v1544
        %v1546 = vpop.f32.mrf.mxu0
        %1547 = vmatprep.mubr.f32.mxu0 0.0
        %1548 = vmatmul.mubr.f32.gmra.mxu0 %v1451
        %v1549 = vpop.f32.mrf.mxu0
        %v1550 = vadd.f32 0.0, %v1549
        %v1551 = vpop.f32.mrf.mxu0
        %1552 = vmatprep.mubr.f32.mxu0 0.0
        %1553 = vmatmul.mubr.f32.gmra.mxu0 %v1452
        %v1554 = vpop.f32.mrf.mxu0
        %v1555 = vadd.f32 0.0, %v1554
        %v1556 = vpop.f32.mrf.mxu0
        %1557 = vdwg.mxu0
        %v1558 = vmul.f32 %v1520, 1.442695
        %v1559 = vpow.pop %v1558
        %v1560 = vmul.f32 %v1525, 1.442695
        %v1561 = vpow.pop %v1560
        %v1562 = vmul.f32 %v1530, 1.442695
        %v1563 = vpow.pop %v1562
        %v1564 = vmul.f32 %v1535, 1.442695
        %v1565 = vpow.pop %v1564
        %vm1566 = vcmp.gt.f32.partialorder %v1520, 0.0
        %vm1567 = vcmp.gt.f32.partialorder %v1525, 0.0
        %vm1568 = vcmp.gt.f32.partialorder %v1530, 0.0
        %vm1569 = vcmp.gt.f32.partialorder %v1535, 0.0
        %v1570 = vsub.f32 %v1559, 1.0
        %v1571 = vsub.f32 %v1561, 1.0
        %v1572 = vsub.f32 %v1563, 1.0
        %v1573 = vsub.f32 %v1565, 1.0
        %v1574 = vmul.f32 %v1570, 1.6732632
        %v1575 = vmul.f32 %v1571, 1.6732632
        %v1576 = vmul.f32 %v1572, 1.6732632
        %v1577 = vmul.f32 %v1573, 1.6732632
        %v1578 = vsel %vm1566, %v1520, %v1574
        %v1579 = vsel %vm1567, %v1525, %v1575
        %v1580 = vsel %vm1568, %v1530, %v1576
        %v1581 = vsel %vm1569, %v1535, %v1577
        %v1582 = vmul.f32 %v1578, 1.050701
        %v1583 = vmul.f32 %v1579, 1.050701
        %v1584 = vmul.f32 %v1580, 1.050701
        %v1585 = vmul.f32 %v1581, 1.050701
        %v1586 = vmul.f32 %v1559, 1.6732632
        %v1587 = vmul.f32 %v1561, 1.6732632
        %v1588 = vmul.f32 %v1563, 1.6732632
        %v1589 = vmul.f32 %v1565, 1.6732632
        %v1590 = vsel %vm1566, 1.0, %v1586
        %v1591 = vsel %vm1567, 1.0, %v1587
        %v1592 = vsel %vm1568, 1.0, %v1588
        %v1593 = vsel %vm1569, 1.0, %v1589
        %v1594 = vmul.f32 %v1590, 1.050701
        %v1595 = vmul.f32 %v1591, 1.050701
        %v1596 = vmul.f32 %v1592, 1.050701
        %v1597 = vmul.f32 %v1593, 1.050701
        %v1598 = vmul.f32 %v1540, %v1594
        %v1599 = vmul.f32 %v1545, %v1595
        %v1600 = vmul.f32 %v1550, %v1596
        %v1601 = vmul.f32 %v1555, %v1597
        %v1602 = vmul.f32 %v1598, %v1594
        %v1603 = vmul.f32 %v1599, %v1595
        %v1604 = vmul.f32 %v1600, %v1596
        %v1605 = vmul.f32 %v1601, %v1597
        %1606 = vst [vmem:[#allocation2] sm:$0xff] %v1582
        %1607 = vst [vmem:[#allocation2 + $0x8] sm:$0xff] %v1583
        %1608 = vst [vmem:[#allocation2 + $0x10] sm:$0xff] %v1584
        %1609 = vst [vmem:[#allocation2 + $0x18] sm:$0xff] %v1585
        %v1610 = vmul.f32 %v1582, %v1582
        %v1611 = vmul.f32 %v1583, %v1583
        %v1612 = vmul.f32 %v1584, %v1584
        %v1613 = vmul.f32 %v1585, %v1585
        %v1614 = vadd.f32 %v1610, %v1602
        %v1615 = vadd.f32 %v1611, %v1603
        %v1616 = vadd.f32 %v1612, %v1604
        %v1617 = vadd.f32 %v1613, %v1605
        %1618 = vst [vmem:[#allocation2 + $0x20] sm:$0xff] %v1614
        %1619 = vst [vmem:[#allocation2 + $0x28] sm:$0xff] %v1615
        %1620 = vst [vmem:[#allocation2 + $0x30] sm:$0xff] %v1616
        %1621 = vst [vmem:[#allocation2 + $0x38] sm:$0xff] %v1617
        %1622 = vst [vmem:[#allocation2 + $0x40] sm:$0xff] %v1602
        %1623 = vst [vmem:[#allocation2 + $0x48] sm:$0xff] %v1603
        %1624 = vst [vmem:[#allocation2 + $0x50] sm:$0xff] %v1604
        %1625 = vst [vmem:[#allocation2 + $0x58] sm:$0xff] %v1605
        %v1626 = vld [vmem:[#allocation2] sm:$0xff]
        %v1627 = vld [vmem:[#allocation2 + $0x8] sm:$0xff]
        %v1628 = vld [vmem:[#allocation2 + $0x10] sm:$0xff]
        %v1629 = vld [vmem:[#allocation2 + $0x18] sm:$0xff]
        %v1630 = vld [vmem:[#allocation2 + $0x20] sm:$0xff]
        %v1631 = vld [vmem:[#allocation2 + $0x28] sm:$0xff]
        %v1632 = vld [vmem:[#allocation2 + $0x30] sm:$0xff]
        %v1633 = vld [vmem:[#allocation2 + $0x38] sm:$0xff]
        %v1634 = vld [vmem:[#allocation2 + $0x40] sm:$0xff]
        %v1635 = vld [vmem:[#allocation2 + $0x48] sm:$0xff]
        %v1636 = vld [vmem:[#allocation2 + $0x50] sm:$0xff]
        %v1637 = vld [vmem:[#allocation2 + $0x58] sm:$0xff]
        %v1638 = vld [vmem:[#allocation2 + $0x60] sm:$0xff]
        %v1639 = vld [vmem:[#allocation2 + $0x68] sm:$0xff]
        %v1640 = vld [vmem:[#allocation2 + $0x70] sm:$0xff]
        %v1641 = vld [vmem:[#allocation2 + $0x78] sm:$0xff]
        %s1642 = scalar_lea.vmem [#allocation3], 448
        %v1643 = vld [vmem:[%s1642] sm:$0xff]
        %v1644 = vld [vmem:[%s1642 + $0x8] sm:$0xff]
        %v1645 = vld [vmem:[%s1642 + $0x10] sm:$0xff]
        %v1646 = vld [vmem:[%s1642 + $0x18] sm:$0xff]
        %v1647 = vld [vmem:[%s1642 + $0x20] sm:$0xff]
        %v1648 = vld [vmem:[%s1642 + $0x28] sm:$0xff]
        %v1649 = vld [vmem:[%s1642 + $0x30] sm:$0xff]
        %v1650 = vld [vmem:[%s1642 + $0x38] sm:$0xff]
        %1651 = vmatprep.subr.mxu0 0.0
        %1652 = vmatpush1.msra.mxu0 %v1641
        %1653 = vmatprep.subr.mxu0 0.0
        %1654 = vmatpush1.msra.mxu0 %v1640
        %1655 = vmatprep.subr.mxu0 0.0
        %1656 = vmatpush1.msra.mxu0 %v1639
        %1657 = vmatprep.subr.mxu0 0.0
        %1658 = vmatpush1.msra.mxu0 %v1638
        %1659 = vmatprep.subr.mxu0 0.0
        %1660 = vmatpush1.msra.mxu0 %v1637
        %1661 = vmatprep.subr.mxu0 0.0
        %1662 = vmatpush1.msra.mxu0 %v1636
        %1663 = vmatprep.subr.mxu0 0.0
        %1664 = vmatpush1.msra.mxu0 %v1635
        %1665 = vmatprep.subr.mxu0 0.0
        %1666 = vmatpush1.msra.mxu0 %v1634
        %1667 = vmatprep.subr.mxu0 0.0
        %1668 = vmatpush1.msra.mxu0 %v1633
        %1669 = vmatprep.subr.mxu0 0.0
        %1670 = vmatpush1.msra.mxu0 %v1632
        %1671 = vmatprep.subr.mxu0 0.0
        %1672 = vmatpush1.msra.mxu0 %v1631
        %1673 = vmatprep.subr.mxu0 0.0
        %1674 = vmatpush1.msra.mxu0 %v1630
        %1675 = vmatprep.subr.mxu0 0.0
        %1676 = vmatpush1.msra.mxu0 %v1629
        %1677 = vmatprep.subr.mxu0 0.0
        %1678 = vmatpush1.msra.mxu0 %v1628
        %1679 = vmatprep.subr.mxu0 0.0
        %1680 = vmatpush1.msra.mxu0 %v1627
        %1681 = vmatprep.subr.mxu0 0.0
        %1682 = vmatpush1.msra.mxu0 %v1626
        %1683 = vmatprep.subr.mxu0 0.0
        %1684 = vmatpush2.msra.mxu0 0.0
        %1685 = vmatprep.subr.mxu0 0.0
        %1686 = vmatpush2.msra.mxu0 0.0
        %1687 = vmatprep.subr.mxu0 0.0
        %1688 = vmatpush2.msra.mxu0 0.0
        %1689 = vmatprep.subr.mxu0 0.0
        %1690 = vmatpush2.msra.mxu0 0.0
        %1691 = vmatprep.subr.mxu0 0.0
        %1692 = vmatpush2.msra.mxu0 0.0
        %1693 = vmatprep.subr.mxu0 0.0
        %1694 = vmatpush2.msra.mxu0 0.0
        %1695 = vmatprep.subr.mxu0 0.0
        %1696 = vmatpush2.msra.mxu0 0.0
        %1697 = vmatprep.subr.mxu0 0.0
        %1698 = vmatpush2.msra.mxu0 0.0
        %1699 = vmatprep.subr.mxu0 0.0
        %1700 = vmatpush2.msra.mxu0 0.0
        %1701 = vmatprep.subr.mxu0 0.0
        %1702 = vmatpush2.msra.mxu0 0.0
        %1703 = vmatprep.subr.mxu0 0.0
        %1704 = vmatpush2.msra.mxu0 0.0
        %1705 = vmatprep.subr.mxu0 0.0
        %1706 = vmatpush2.msra.mxu0 0.0
        %1707 = vmatprep.subr.mxu0 0.0
        %1708 = vmatpush2.msra.mxu0 0.0
        %1709 = vmatprep.subr.mxu0 0.0
        %1710 = vmatpush2.msra.mxu0 0.0
        %1711 = vmatprep.subr.mxu0 0.0
        %1712 = vmatpush2.msra.mxu0 0.0
        %1713 = vmatprep.subr.mxu0 0.0
        %1714 = vmatpush2.msra.mxu0 0.0
        %1715 = vmatprep.mubr.f32.mxu0 0.0
        %1716 = vmatmul.mubr.f32.gmra.mxu0 %v1643
        %v1717 = vpop.f32.mrf.mxu0
        %v1718 = vadd.f32 0.0, %v1717
        %v1719 = vpop.f32.mrf.mxu0
        %1720 = vmatprep.mubr.f32.mxu0 0.0
        %1721 = vmatmul.mubr.f32.gmra.mxu0 %v1644
        %v1722 = vpop.f32.mrf.mxu0
        %v1723 = vadd.f32 0.0, %v1722
        %v1724 = vpop.f32.mrf.mxu0
        %1725 = vmatprep.mubr.f32.mxu0 0.0
        %1726 = vmatmul.mubr.f32.gmra.mxu0 %v1645
        %v1727 = vpop.f32.mrf.mxu0
        %v1728 = vadd.f32 0.0, %v1727
        %v1729 = vpop.f32.mrf.mxu0
        %1730 = vmatprep.mubr.f32.mxu0 0.0
        %1731 = vmatmul.mubr.f32.gmra.mxu0 %v1646
        %v1732 = vpop.f32.mrf.mxu0
        %v1733 = vadd.f32 0.0, %v1732
        %v1734 = vpop.f32.mrf.mxu0
        %1735 = vmatprep.mubr.f32.mxu0 0.0
        %1736 = vmatmul.mubr.f32.gmra.mxu0 %v1647
        %v1737 = vpop.f32.mrf.mxu0
        %v1738 = vadd.f32 0.0, %v1737
        %v1739 = vpop.f32.mrf.mxu0
        %1740 = vmatprep.mubr.f32.mxu0 0.0
        %1741 = vmatmul.mubr.f32.gmra.mxu0 %v1648
        %v1742 = vpop.f32.mrf.mxu0
        %v1743 = vadd.f32 0.0, %v1742
        %v1744 = vpop.f32.mrf.mxu0
        %1745 = vmatprep.mubr.f32.mxu0 0.0
        %1746 = vmatmul.mubr.f32.gmra.mxu0 %v1649
        %v1747 = vpop.f32.mrf.mxu0
        %v1748 = vadd.f32 0.0, %v1747
        %v1749 = vpop.f32.mrf.mxu0
        %1750 = vmatprep.mubr.f32.mxu0 0.0
        %1751 = vmatmul.mubr.f32.gmra.mxu0 %v1650
        %v1752 = vpop.f32.mrf.mxu0
        %v1753 = vadd.f32 0.0, %v1752
        %v1754 = vpop.f32.mrf.mxu0
        %1755 = vdwg.mxu0
        %vm1756 = vcmp.lt.s32.totalorder %v201, 3
        %vm1757 = vcmp.lt.s32.totalorder %v202, 3
        %vm1758 = vcmp.lt.s32.totalorder %v203, 3
        %vm1759 = vcmp.lt.s32.totalorder %v204, 3
        %v1760 = vsel %vm1756, %v1718, -1e+30
        %v1761 = vsel %vm1757, %v1723, -1e+30
        %v1762 = vsel %vm1758, %v1728, -1e+30
        %v1763 = vsel %vm1759, %v1733, -1e+30
        %v1764 = vmax.f32 %v1760, %v1761
        %v1765 = vmax.f32 %v1762, %v1763
        %v1766 = vmax.f32 %v1764, %v1765
        %v1767 = vrot.slane %v1766, 4
        %v1768 = vmax.f32 %v1766, %v1767
        %v1769 = vrot.slane %v1768, 2
        %v1770 = vmax.f32 %v1768, %v1769
        %v1771 = vrot.slane %v1770, 1
        %v1772 = vmax.f32 %v1770, %v1771
        %v1773 = vsub.f32 %v1760, %v1772
        %v1774 = vsub.f32 %v1761, %v1772
        %v1775 = vsub.f32 %v1762, %v1772
        %v1776 = vsub.f32 %v1763, %v1772
        %v1777 = vmul.f32 %v1773, 1.442695
        %v1778 = vpow.pop %v1777
        %v1779 = vmul.f32 %v1774, 1.442695
        %v1780 = vpow.pop %v1779
        %v1781 = vmul.f32 %v1775, 1.442695
        %v1782 = vpow.pop %v1781
        %v1783 = vmul.f32 %v1776, 1.442695
        %v1784 = vpow.pop %v1783
        %v1785 = vsel %vm1756, %v1778, 0.0
        %v1786 = vsel %vm1757, %v1780, 0.0
        %v1787 = vsel %vm1758, %v1782, 0.0
        %v1788 = vsel %vm1759, %v1784, 0.0
        %v1789 = vadd.f32 %v1785, %v1786
        %v1790 = vadd.f32 %v1789, %v1787
        %v1791 = vadd.f32 %v1790, %v1788
        %v1792 = vrot.slane %v1791, 4
        %v1793 = vadd.f32 %v1791, %v1792
        %v1794 = vrot.slane %v1793, 2
        %v1795 = vadd.f32 %v1793, %v1794
        %v1796 = vrot.slane %v1795, 1
        %v1797 = vadd.f32 %v1795, %v1796
        %v1798 = vrcp.pop %v1797
        %v1799 = vmul.f32 %v1797, %v1798
        %v1800 = vsub.f32 2.0, %v1799
        %v1801 = vmul.f32 %v1798, %v1800
        %v1802 = vmul.f32 %v1785, %v1801
        %v1803 = vmul.f32 %v1786, %v1801
        %v1804 = vmul.f32 %v1787, %v1801
        %v1805 = vmul.f32 %v1788, %v1801
        %v1806 = vsub.f32 1.0, %v1802
        %v1807 = vsub.f32 1.0, %v1803
        %v1808 = vsub.f32 1.0, %v1804
        %v1809 = vsub.f32 1.0, %v1805
        %v1810 = vmul.f32 %v1802, %v1806
        %v1811 = vmul.f32 %v1803, %v1807
        %v1812 = vmul.f32 %v1804, %v1808
        %v1813 = vmul.f32 %v1805, %v1809
        %1814 = vst [vmem:[%s199] sm:$0xff] %v1802
        %1815 = vst [vmem:[%s199 + $0x8] sm:$0xff] %v1803
        %1816 = vst [vmem:[%s199 + $0x10] sm:$0xff] %v1804
        %1817 = vst [vmem:[%s199 + $0x18] sm:$0xff] %v1805
        %v1818 = vmul.f32 %v1738, %v1810
        %v1819 = vmul.f32 %v1743, %v1811
        %v1820 = vmul.f32 %v1748, %v1812
        %v1821 = vmul.f32 %v1753, %v1813
        %v1822 = vmul.f32 %v1818, %v1810
        %v1823 = vmul.f32 %v1819, %v1811
        %v1824 = vmul.f32 %v1820, %v1812
        %v1825 = vmul.f32 %v1821, %v1813
        %1826 = vst [vmem:[%s199 + $0x20] sm:$0xff] %v1822
        %1827 = vst [vmem:[%s199 + $0x28] sm:$0xff] %v1823
        %1828 = vst [vmem:[%s199 + $0x30] sm:$0xff] %v1824
        %1829 = vst [vmem:[%s199 + $0x38] sm:$0xff] %v1825
        %s1830 = sand.u32 %s69, 1
        %s1831 = sand.u32 %s69, 1
        %s1832 = smul.addr %s1831, 64
        %s1833 = scalar_lea.vmem [#allocation6], %s1832
        // Predicated region
        $region71: #{_lambda_.1} parent=61 // pred_check
          %p1834 = pneg %p79
        $region72: #{_lambda_.1} parent=61 // pred_check_branch
          %1836 = sbr.rel (%p1834) target = $region74
        $region73: #{_lambda_.1} parent=61 // pred_region
          %s1837 = smul.addr %s14, 8
          %s1838 = scalar_lea.vmem %s2, %s1837
          // Predicated region
          $region75: #{_lambda_.1} parent=73 // pred_check
            _
          $region76: #{_lambda_.1} parent=73 // pred_check_branch
            %1840 = sbr.rel (0) target = $region78
          $region77: #{_lambda_.1} parent=73 // pred_region
            // Predicated region
            $region79: #{_lambda_.1} parent=77 // pred_check
              _
            $region80: #{_lambda_.1} parent=77 // pred_check_branch
              %1842 = sbr.rel (0) target = $region82
            $region81: #{_lambda_.1} parent=77 // pred_region
              // Predicated region
              $region94: #{_lambda_.1} parent=81 // pred_check
                _
              $region95: #{_lambda_.1} parent=81 // pred_check_branch
                %1872 = sbr.rel (0) target = $region97
              $region96: #{_lambda_.1} parent=81 // pred_region
                loop: start=0, step=1, limit=1
                $region98: #{_lambda_.1} parent=96 // loop_pre_header
                  _
                $region99: #{_lambda_.1} parent=96 // loop_header
                  %s1874 = sphi 0, %s1878
                  %p1875 = scmp.ge.s32.totalorder %s1874, 1
                  %s1879 = sphi %s1833, %s1833
                  %s1880 = sphi %s1838, %s1838
                $region100: #{_lambda_.1} parent=96 // loop_header_branch
                  %1877 = sbr.rel (%p1875) target = $region104
                $region101: #{_lambda_.1} parent=96 // loop_body
                  %v1881 = vld [vmem:[%s1879] sm:$0xff]
                  %1882 = vst [vmem:[%s1880] sm:$0xff] %v1881
                  %v1883 = vld [vmem:[%s1879 + $0x8] sm:$0xff]
                  %1884 = vst [vmem:[%s1880 + $0x10] sm:$0xff] %v1883
                  %v1885 = vld [vmem:[%s1879 + $0x10] sm:$0xff]
                  %1886 = vst [vmem:[%s1880 + $0x20] sm:$0xff] %v1885
                  %v1887 = vld [vmem:[%s1879 + $0x18] sm:$0xff]
                  %1888 = vst [vmem:[%s1880 + $0x30] sm:$0xff] %v1887
                  %v1889 = vld [vmem:[%s1879 + $0x20] sm:$0xff]
                  %1890 = vst [vmem:[%s1880 + $0x40] sm:$0xff] %v1889
                  %v1891 = vld [vmem:[%s1879 + $0x28] sm:$0xff]
                  %1892 = vst [vmem:[%s1880 + $0x50] sm:$0xff] %v1891
                  %v1893 = vld [vmem:[%s1879 + $0x30] sm:$0xff]
                  %1894 = vst [vmem:[%s1880 + $0x60] sm:$0xff] %v1893
                  %v1895 = vld [vmem:[%s1879 + $0x38] sm:$0xff]
                  %1896 = vst [vmem:[%s1880 + $0x70] sm:$0xff] %v1895
                $region102: #{_lambda_.1} parent=96 // loop_footer
                  %s1878 = sadd.s32 1, %s1874
                $region103: #{_lambda_.1} parent=96 // loop_footer_branch
                  %1873 = sbr.rel target = $region99
                $region104: #{_lambda_.1} parent=96 // loop_exit
                  _
              $region97: #{_lambda_.1} parent=81 // pred_fallthru
                _
              // Predicated region
              $region105: #{_lambda_.1} parent=81 // pred_check
                _
              $region106: #{_lambda_.1} parent=81 // pred_check_branch
                %1898 = sbr.rel target = $region108
              $region107: #{_lambda_.1} parent=81 // pred_region
                _
              $region108: #{_lambda_.1} parent=81 // pred_fallthru
                _
            $region82: #{_lambda_.1} parent=77 // pred_fallthru
              _
            // Predicated region
            $region83: #{_lambda_.1} parent=77 // pred_check
              _
            $region84: #{_lambda_.1} parent=77 // pred_check_branch
              %1844 = sbr.rel target = $region86
            $region85: #{_lambda_.1} parent=77 // pred_region
              %s1846 = ssub.s32 256, 1
              loop: start=0, step=1, limit=1
              $region87: #{_lambda_.1} parent=85 // loop_pre_header
                _
              $region88: #{_lambda_.1} parent=85 // loop_header
                %s1848 = sphi 0, %s1852
                %p1849 = scmp.ge.s32.totalorder %s1848, 1
                %s1853 = sphi %s1833, %s1833
                %s1854 = sphi %s1838, %s1838
              $region89: #{_lambda_.1} parent=85 // loop_header_branch
                %1851 = sbr.rel (%p1849) target = $region93
              $region90: #{_lambda_.1} parent=85 // loop_body
                %v1855 = vld [vmem:[%s1853] sm:%s1846]
                %1856 = vst [vmem:[%s1854] sm:%s1846] %v1855
                %v1857 = vld [vmem:[%s1853 + $0x8] sm:%s1846]
                %1858 = vst [vmem:[%s1854 + $0x10] sm:%s1846] %v1857
                %v1859 = vld [vmem:[%s1853 + $0x10] sm:%s1846]
                %1860 = vst [vmem:[%s1854 + $0x20] sm:%s1846] %v1859
                %v1861 = vld [vmem:[%s1853 + $0x18] sm:%s1846]
                %1862 = vst [vmem:[%s1854 + $0x30] sm:%s1846] %v1861
                %v1863 = vld [vmem:[%s1853 + $0x20] sm:%s1846]
                %1864 = vst [vmem:[%s1854 + $0x40] sm:%s1846] %v1863
                %v1865 = vld [vmem:[%s1853 + $0x28] sm:%s1846]
                %1866 = vst [vmem:[%s1854 + $0x50] sm:%s1846] %v1865
                %v1867 = vld [vmem:[%s1853 + $0x30] sm:%s1846]
                %1868 = vst [vmem:[%s1854 + $0x60] sm:%s1846] %v1867
                %v1869 = vld [vmem:[%s1853 + $0x38] sm:%s1846]
                %1870 = vst [vmem:[%s1854 + $0x70] sm:%s1846] %v1869
              $region91: #{_lambda_.1} parent=85 // loop_footer
                %s1852 = sadd.s32 1, %s1848
              $region92: #{_lambda_.1} parent=85 // loop_footer_branch
                %1847 = sbr.rel target = $region88
              $region93: #{_lambda_.1} parent=85 // loop_exit
                _
            $region86: #{_lambda_.1} parent=77 // pred_fallthru
              _
          $region78: #{_lambda_.1} parent=73 // pred_fallthru
            _
          %1899 = vnop
        $region74: #{_lambda_.1} parent=61 // pred_fallthru
          _
      $region62: #{_lambda_.1} parent=5 // pred_fallthru
        _
      %p1900 = scmp.le.s32.totalorder 2, %s9
      // Predicated region
      $region109: #{_lambda_.1} parent=5 // pred_check
        %p1901 = pneg %p1900
      $region110: #{_lambda_.1} parent=5 // pred_check_branch
        %1903 = sbr.rel (%p1901) target = $region112
      $region111: #{_lambda_.1} parent=5 // pred_region
        %s1904 = ssub.s32 %s9, 2
        // Predicated region
        $region113: #{_lambda_.1} parent=111 // pred_check
          %p1905 = pneg %p85
        $region114: #{_lambda_.1} parent=111 // pred_check_branch
          %1907 = sbr.rel (%p1905) target = $region116
        $region115: #{_lambda_.1} parent=111 // pred_region
          %s1908 = sand.u32 %s70, 1
          %s1909 = sand.u32 %s70, 1
          %s1910 = smul.addr %s1909, 64
          %s1911 = scalar_lea.vmem [#allocation6], %s1910
        $region116: #{_lambda_.1} parent=111 // pred_fallthru
          _
      $region112: #{_lambda_.1} parent=5 // pred_fallthru
        _
    $region6: #{_lambda_.1} parent=1 // loop_footer
      %s13 = sadd.s32 1, %s9
    $region7: #{_lambda_.1} parent=1 // loop_footer_branch
      %8 = sbr.rel target = $region3
    $region8: #{_lambda_.1} parent=1 // loop_exit
      _
    %1912 = vsyncpa [#allocation4], 1
    %s1913 = scalar_lea.sflag [#allocation4], 1
    %1914 = vsyncpa %s1913, 1

</llo_original>
